<compile_context>
chip_gen: v6e
topology: v6e:2x2x1
jax: 0.10.0
libtpu: 0.0.40
codegen_flags: <defaults>
</compile_context>

<pallas_src>
import numpy as np
import jax
import jax.numpy as jnp
from jax.experimental import pallas as pl
from jax.experimental.pallas import tpu as pltpu

# ----------------------------- module config -------------------------------
IN_CH, OUT_CH = 4, 8
ALPHA_IN, ALPHA_OUT = 0.5, 0.5
IN_G = int(IN_CH * ALPHA_IN)
IN_L = IN_CH - IN_G
OUT_G = int(OUT_CH * ALPHA_OUT)
OUT_L = OUT_CH - OUT_G
C1 = OUT_G // 2           # SpectralTransform hidden channels
BN_EPS = 1e-5


# ------------------- DFT-as-matmul operators (exact, ortho) ----------------

def build_rfft2_mats(h, w):
    """Two (H*W, H*Wf) real matrices: flat image -> real / imag of rfft2('ortho')."""
    wf = w // 2 + 1
    basis = np.eye(h * w, dtype=np.float64).reshape(h * w, h, w)
    spec = np.fft.rfft2(basis, norm='ortho').reshape(h * w, h * wf)
    return (np.ascontiguousarray(spec.real).astype(np.float32),
            np.ascontiguousarray(spec.imag).astype(np.float32))


def build_irfft2_mats(h, w):
    """Two (H*Wf, H*W) real matrices: real / imag half-spectrum -> irfft2('ortho')."""
    wf = w // 2 + 1
    basis = np.eye(h * wf, dtype=np.complex128).reshape(h * wf, h, wf)
    inv_re = np.fft.irfft2(basis, s=(h, w), norm='ortho').reshape(h * wf, h * w)
    inv_im = np.fft.irfft2(1j * basis, s=(h, w), norm='ortho').reshape(h * wf, h * w)
    return inv_re.astype(np.float32), inv_im.astype(np.float32)


# ----------------------------- fused FFC kernel -----------------------------

def ffc_forward(x, params, mf_re, mf_im, mi_re, mi_im):
    n, cin, h, w = x.shape
    assert cin == IN_CH
    hw = h * w
    wf = w // 2 + 1
    hwf = h * wf
    f32 = jnp.float32
    eye_n = jnp.eye(n, dtype=f32)

    # ---- plain-JAX glue (one-time weight re-layout; runs once under jit) ----
    # Fold all "first layer" 1x1 convs into one weight (rows: out_l | conv1 | l2g).
    w_first = jnp.concatenate([
        jnp.concatenate([params['w_l2l'], params['w_g2l']], axis=1),
        jnp.concatenate([jnp.zeros((C1, IN_L), f32), params['w_conv1']], axis=1),
        jnp.concatenate([params['w_l2g'], jnp.zeros((OUT_G, IN_G), f32)], axis=1),
    ], axis=0)                                             # (OUT_L + C1 + OUT_G, IN_CH)
    w_first_k = jnp.kron(w_first, eye_n)                   # channel rows -> (c, batch) rows
    w_spec_re_k = jnp.kron(params['w_spec'][:, :C1], eye_n)   # (2*C1*n, C1*n)
    w_spec_im_k = jnp.kron(params['w_spec'][:, C1:], eye_n)
    w_conv2_k = jnp.kron(params['w_conv2'], eye_n)             # (OUT_G*n, C1*n)

    # Per-channel-mean broadcast matrices for training-mode BatchNorm and
    # row-expanded affine params (channel-major rows = c*N + b).
    p_bn1 = jnp.kron(jnp.eye(C1, dtype=f32), jnp.ones((n, n), f32)) / (n * hw)
    p_bns = jnp.kron(jnp.eye(2 * C1, dtype=f32), jnp.ones((n, n), f32)) / (n * hwf)
    g1 = jnp.repeat(params['bn1_gamma'], n).reshape(-1, 1).astype(f32)
    b1 = jnp.repeat(params['bn1_beta'], n).reshape(-1, 1).astype(f32)
    gs = jnp.repeat(params['bns_gamma'], n).reshape(-1, 1).astype(f32)
    bs = jnp.repeat(params['bns_beta'], n).reshape(-1, 1).astype(f32)

    # NCHW -> channel-major rows (c*N + b), lane-dense spatial columns (H*W).
    x_rows = jnp.transpose(x, (1, 0, 2, 3)).reshape(cin * n, hw)
    out_rows_shape = (OUT_CH * n, hw)

    def kernel(x_ref, wf_ref, wsr_ref, wsi_ref, wc2_ref,
               p1_ref, g1_ref, b1_ref, ps_ref, gs_ref, bs_ref,
               mfr_ref, mfi_ref, mir_ref, mii_ref, o_ref):

        def bn_relu(z, p, gamma, beta):
            # Training-mode BatchNorm (biased batch stats over N,H,W per channel)
            # followed by ReLU.  p broadcasts per-channel stats to all batch rows.
            rs = jnp.sum(z, axis=1, keepdims=True)
            mean = jnp.dot(p, rs, preferred_element_type=f32)
            diff = z - mean
            var = jnp.dot(p, jnp.sum(diff * diff, axis=1, keepdims=True),
                          preferred_element_type=f32)
            return jnp.maximum(diff * jax.lax.rsqrt(var + BN_EPS) * gamma + beta, 0.0)

        xv = x_ref[...]                                            # (IN_CH*n, HW)

        # One wide matmul for l2l + g2l + conv1 + l2g (lane-dense output).
        first = jnp.dot(wf_ref[...], xv, preferred_element_type=f32)
        out_l = first[0:OUT_L * n]                                 # (OUT_L*n, HW)
        t_pre = first[OUT_L * n:(OUT_L + C1) * n]                  # (C1*n, HW)
        l2g = first[(OUT_L + C1) * n:]                             # (OUT_G*n, HW)

        # SpectralTransform.conv1: BN + ReLU epilogue.
        t = bn_relu(t_pre, p1_ref[...], g1_ref[...], b1_ref[...])  # (C1*n, HW)

        # -------- FourierUnit --------
        # rfft2('ortho') as two real matmuls (real/imag kept separate).
        s_re = jnp.dot(t, mfr_ref[...], preferred_element_type=f32)   # (C1*n, HWf)
        s_im = jnp.dot(t, mfi_ref[...], preferred_element_type=f32)
        # spectrum 1x1 conv (bias=False) as two accumulating matmuls + BN + ReLU.
        y_spec = (jnp.dot(wsr_ref[...], s_re, preferred_element_type=f32)
                  + jnp.dot(wsi_ref[...], s_im, preferred_element_type=f32))
        y_spec = bn_relu(y_spec, ps_ref[...], gs_ref[...], bs_ref[...])  # (2*C1*n, HWf)
        # split(c, dim=1): first C1 channels -> real, last C1 -> imag.
        z_re = y_spec[0:C1 * n]
        z_im = y_spec[C1 * n:]
        # irfft2('ortho') as two accumulating real matmuls.
        y = (jnp.dot(z_re, mir_ref[...], preferred_element_type=f32)
             + jnp.dot(z_im, mii_ref[...], preferred_element_type=f32))  # (C1*n, HW)

        # conv2(t + y) + l2g  (adds folded in-kernel).
        out_g = jnp.dot(wc2_ref[...], t + y, preferred_element_type=f32) + l2g

        o_ref[0:OUT_L * n, :] = out_l
        o_ref[OUT_L * n:, :] = out_g

    inputs = (x_rows, w_first_k, w_spec_re_k, w_spec_im_k, w_conv2_k,
              p_bn1, g1, b1, p_bns, gs, bs, mf_re, mf_im, mi_re, mi_im)

    def full_spec(a):
        nd = a.ndim
        return pl.BlockSpec(a.shape, lambda i: (0,) * nd)

    out_rows = pl.pallas_call(
        kernel,
        out_shape=jax.ShapeDtypeStruct(out_rows_shape, f32),
        grid=(1,),
        in_specs=[full_spec(a) for a in inputs],
        out_specs=pl.BlockSpec(out_rows_shape, lambda i: (0, 0)),
        compiler_params=pltpu.CompilerParams(
            dimension_semantics=("arbitrary",)),
    )(*inputs)

    # channel-major rows -> NCHW
    return jnp.transpose(out_rows.reshape(OUT_CH, n, h, w), (1, 0, 2, 3))


# --------------------------- params & reference -----------------------------

def init_params(key):
    ks = jax.random.split(key, 6)

    def wmat(k, co, ci):
        return jax.random.normal(k, (co, ci), jnp.float32) / np.sqrt(ci)

    return dict(
        w_l2l=wmat(ks[0], OUT_L, IN_L),
        w_g2l=wmat(ks[1], OUT_L, IN_G),
        w_l2g=wmat(ks[2], OUT_G, IN_L),
        w_conv1=wmat(ks[3], C1, IN_G),
        bn1_gamma=jnp.ones((C1,), jnp.float32),
        bn1_beta=jnp.zeros((C1,), jnp.float32),
        w_spec=wmat(ks[4], 2 * C1, 2 * C1),
        bns_gamma=jnp.ones((2 * C1,), jnp.float32),
        bns_beta=jnp.zeros((2 * C1,), jnp.float32),
        w_conv2=wmat(ks[5], OUT_G, C1),
    )


def reference_forward(x, params):
    # Pure-JAX mirror of the PyTorch forward (for validation).
    def conv1x1(z, wmat):
        return jnp.einsum('nchw,oc->nohw', z, wmat)

    def bn_relu(z, g, b):
        mean = jnp.mean(z, axis=(0, 2, 3), keepdims=True)
        var = jnp.var(z, axis=(0, 2, 3), keepdims=True)
        y = (z - mean) / jnp.sqrt(var + BN_EPS)
        y = y * g.reshape(1, -1, 1, 1) + b.reshape(1, -1, 1, 1)
        return jnp.maximum(y, 0.0)

    def fu(z, w_spec, g, b):
        n, c, hh, ww = z.shape
        spec = jnp.fft.rfft2(z, norm='ortho')
        s = jnp.concatenate([spec.real, spec.imag], axis=1)
        s = bn_relu(conv1x1(s, w_spec), g, b)
        return jnp.fft.irfft2(s[:, :c] + 1j * s[:, c:], s=(hh, ww), norm='ortho')

    x_l, x_g = x[:, :IN_L], x[:, IN_L:]
    out_l = conv1x1(x_g, params['w_g2l']) + conv1x1(x_l, params['w_l2l'])
    t = bn_relu(conv1x1(x_g, params['w_conv1']), params['bn1_gamma'], params['bn1_beta'])
    y = fu(t, params['w_spec'], params['bns_gamma'], params['bns_beta'])
    out_g = conv1x1(t + y, params['w_conv2']) + conv1x1(x_l, params['w_l2g'])
    return jnp.concatenate([out_l, out_g], axis=1)


# --------------------------------- main -------------------------------------

if __name__ == "__main__":
    N, H, W = 2, 16, 16
    key = jax.random.PRNGKey(0)
    k_x, k_p = jax.random.split(key)
    x = jax.random.normal(k_x, (N, IN_CH, H, W), jnp.float32)
    params = init_params(k_p)

    mf_re_np, mf_im_np = build_rfft2_mats(H, W)     # (H*W, H*Wf) each
    mi_re_np, mi_im_np = build_irfft2_mats(H, W)    # (H*Wf, H*W) each
    mf_re, mf_im = jnp.asarray(mf_re_np), jnp.asarray(mf_im_np)
    mi_re, mi_im = jnp.asarray(mi_re_np), jnp.asarray(mi_im_np)

    fwd = jax.jit(ffc_forward)
    out = fwd(x, params, mf_re, mf_im, mi_re, mi_im)
    out = jax.block_until_ready(out)

    assert out.shape == (N, OUT_CH, H, W), out.shape

    ref = jax.block_until_ready(reference_forward(x, params))
    np.testing.assert_allclose(np.asarray(out), np.asarray(ref),
                               rtol=2e-3, atol=2e-3)

    print("KERNEL_OK")
</pallas_src>

<mosaic_0001>
module attributes {stable_mosaic.version = 11 : i64} {
  func.func @kernel(%arg0: i32, %arg1: memref<8x256xf32, #tpu.memory_space<vmem>>, %arg2: memref<20x8xf32, #tpu.memory_space<vmem>>, %arg3: memref<8x4xf32, #tpu.memory_space<vmem>>, %arg4: memref<8x4xf32, #tpu.memory_space<vmem>>, %arg5: memref<8x4xf32, #tpu.memory_space<vmem>>, %arg6: memref<4x4xf32, #tpu.memory_space<vmem>>, %arg7: memref<4x1xf32, #tpu.memory_space<vmem>>, %arg8: memref<4x1xf32, #tpu.memory_space<vmem>>, %arg9: memref<8x8xf32, #tpu.memory_space<vmem>>, %arg10: memref<8x1xf32, #tpu.memory_space<vmem>>, %arg11: memref<8x1xf32, #tpu.memory_space<vmem>>, %arg12: memref<256x144xf32, #tpu.memory_space<vmem>>, %arg13: memref<256x144xf32, #tpu.memory_space<vmem>>, %arg14: memref<144x256xf32, #tpu.memory_space<vmem>>, %arg15: memref<144x256xf32, #tpu.memory_space<vmem>>, %arg16: memref<16x256xf32, #tpu.memory_space<vmem>>) attributes {dimension_semantics = [#tpu.dimension_semantics<arbitrary>], iteration_bounds = array<i64: 1>, scalar_prefetch = 0 : i64, scratch_operands = 0 : i64, tpu.core_type = #tpu.core_type<tc>, window_params = [{pipeline_mode = #tpu.pipeline_mode<synchronous>, transform_indices = @transform_0, window_bounds = array<i64: 8, 256>}, {pipeline_mode = #tpu.pipeline_mode<synchronous>, transform_indices = @transform_1, window_bounds = array<i64: 20, 8>}, {pipeline_mode = #tpu.pipeline_mode<synchronous>, transform_indices = @transform_2, window_bounds = array<i64: 8, 4>}, {pipeline_mode = #tpu.pipeline_mode<synchronous>, transform_indices = @transform_3, window_bounds = array<i64: 8, 4>}, {pipeline_mode = #tpu.pipeline_mode<synchronous>, transform_indices = @transform_4, window_bounds = array<i64: 8, 4>}, {pipeline_mode = #tpu.pipeline_mode<synchronous>, transform_indices = @transform_5, window_bounds = array<i64: 4, 4>}, {pipeline_mode = #tpu.pipeline_mode<synchronous>, transform_indices = @transform_6, window_bounds = array<i64: 4, 1>}, {pipeline_mode = #tpu.pipeline_mode<synchronous>, transform_indices = @transform_7, window_bounds = array<i64: 4, 1>}, {pipeline_mode = #tpu.pipeline_mode<synchronous>, transform_indices = @transform_8, window_bounds = array<i64: 8, 8>}, {pipeline_mode = #tpu.pipeline_mode<synchronous>, transform_indices = @transform_9, window_bounds = array<i64: 8, 1>}, {pipeline_mode = #tpu.pipeline_mode<synchronous>, transform_indices = @transform_10, window_bounds = array<i64: 8, 1>}, {pipeline_mode = #tpu.pipeline_mode<synchronous>, transform_indices = @transform_11, window_bounds = array<i64: 256, 144>}, {pipeline_mode = #tpu.pipeline_mode<synchronous>, transform_indices = @transform_12, window_bounds = array<i64: 256, 144>}, {pipeline_mode = #tpu.pipeline_mode<synchronous>, transform_indices = @transform_13, window_bounds = array<i64: 144, 256>}, {pipeline_mode = #tpu.pipeline_mode<synchronous>, transform_indices = @transform_14, window_bounds = array<i64: 144, 256>}, {pipeline_mode = #tpu.pipeline_mode<synchronous>, transform_indices = @transform_15, window_bounds = array<i64: 16, 256>}]} {
    %c0 = arith.constant 0 : index
    %c0_0 = arith.constant 0 : index
    %0 = vector.load %arg1[%c0, %c0_0] : memref<8x256xf32, #tpu.memory_space<vmem>>, vector<8x256xf32>
    %c0_1 = arith.constant 0 : index
    %c0_2 = arith.constant 0 : index
    %1 = vector.load %arg2[%c0_1, %c0_2] : memref<20x8xf32, #tpu.memory_space<vmem>>, vector<20x8xf32>
    %cst = arith.constant dense<0.000000e+00> : vector<20x256xf32>
    %2 = tpu.matmul %1, %0, %cst {dimension_numbers = #tpu.dot_dimension_numbers<[1], [0], [0], [1], [0, 0, 1, 1], [], []>} : vector<20x8xf32>, vector<8x256xf32>, vector<20x256xf32> -> vector<20x256xf32>
    %3 = vector.extract_strided_slice %2 {offsets = [0, 0], sizes = [8, 256], strides = [1, 1]} : vector<20x256xf32> to vector<8x256xf32>
    %4 = vector.extract_strided_slice %2 {offsets = [8, 0], sizes = [4, 256], strides = [1, 1]} : vector<20x256xf32> to vector<4x256xf32>
    %5 = vector.extract_strided_slice %2 {offsets = [12, 0], sizes = [8, 256], strides = [1, 1]} : vector<20x256xf32> to vector<8x256xf32>
    %c0_3 = arith.constant 0 : index
    %c0_4 = arith.constant 0 : index
    %6 = vector.load %arg6[%c0_3, %c0_4] : memref<4x4xf32, #tpu.memory_space<vmem>>, vector<4x4xf32>
    %c0_5 = arith.constant 0 : index
    %c0_6 = arith.constant 0 : index
    %7 = vector.load %arg7[%c0_5, %c0_6] : memref<4x1xf32, #tpu.memory_space<vmem>>, vector<4x1xf32>
    %c0_7 = arith.constant 0 : index
    %c0_8 = arith.constant 0 : index
    %8 = vector.load %arg8[%c0_7, %c0_8] : memref<4x1xf32, #tpu.memory_space<vmem>>, vector<4x1xf32>
    %cst_9 = arith.constant dense<0.000000e+00> : vector<4xf32>
    %9 = vector.multi_reduction <add>, %4, %cst_9 [1] : vector<4x256xf32> to vector<4xf32>
    %10 = vector.shape_cast %9 : vector<4xf32> to vector<4x1xf32>
    %cst_10 = arith.constant dense<0.000000e+00> : vector<4x1xf32>
    %11 = tpu.matmul %6, %10, %cst_10 {dimension_numbers = #tpu.dot_dimension_numbers<[1], [0], [0], [1], [0, 0, 1, 1], [], []>} : vector<4x4xf32>, vector<4x1xf32>, vector<4x1xf32> -> vector<4x1xf32>
    %12 = vector.broadcast %11 : vector<4x1xf32> to vector<4x256xf32>
    %13 = arith.subf %4, %12 : vector<4x256xf32>
    %14 = arith.mulf %13, %13 : vector<4x256xf32>
    %cst_11 = arith.constant dense<0.000000e+00> : vector<4xf32>
    %15 = vector.multi_reduction <add>, %14, %cst_11 [1] : vector<4x256xf32> to vector<4xf32>
    %16 = vector.shape_cast %15 : vector<4xf32> to vector<4x1xf32>
    %cst_12 = arith.constant dense<0.000000e+00> : vector<4x1xf32>
    %17 = tpu.matmul %6, %16, %cst_12 {dimension_numbers = #tpu.dot_dimension_numbers<[1], [0], [0], [1], [0, 0, 1, 1], [], []>} : vector<4x4xf32>, vector<4x1xf32>, vector<4x1xf32> -> vector<4x1xf32>
    %cst_13 = arith.constant 9.99999974E-6 : f32
    %18 = vector.broadcast %cst_13 : f32 to vector<4x1xf32>
    %19 = arith.addf %17, %18 : vector<4x1xf32>
    %20 = math.rsqrt %19 : vector<4x1xf32>
    %21 = vector.broadcast %20 : vector<4x1xf32> to vector<4x256xf32>
    %22 = arith.mulf %13, %21 : vector<4x256xf32>
    %23 = vector.broadcast %7 : vector<4x1xf32> to vector<4x256xf32>
    %24 = arith.mulf %22, %23 : vector<4x256xf32>
    %25 = vector.broadcast %8 : vector<4x1xf32> to vector<4x256xf32>
    %26 = arith.addf %24, %25 : vector<4x256xf32>
    %cst_14 = arith.constant 0.000000e+00 : f32
    %27 = vector.broadcast %cst_14 : f32 to vector<4x256xf32>
    %28 = arith.maximumf %26, %27 : vector<4x256xf32>
    %c0_15 = arith.constant 0 : index
    %c0_16 = arith.constant 0 : index
    %29 = vector.load %arg12[%c0_15, %c0_16] : memref<256x144xf32, #tpu.memory_space<vmem>>, vector<256x144xf32>
    %cst_17 = arith.constant dense<0.000000e+00> : vector<4x144xf32>
    %30 = tpu.matmul %28, %29, %cst_17 {dimension_numbers = #tpu.dot_dimension_numbers<[1], [0], [0], [1], [0, 0, 1, 1], [], []>} : vector<4x256xf32>, vector<256x144xf32>, vector<4x144xf32> -> vector<4x144xf32>
    %c0_18 = arith.constant 0 : index
    %c0_19 = arith.constant 0 : index
    %31 = vector.load %arg13[%c0_18, %c0_19] : memref<256x144xf32, #tpu.memory_space<vmem>>, vector<256x144xf32>
    %cst_20 = arith.constant dense<0.000000e+00> : vector<4x144xf32>
    %32 = tpu.matmul %28, %31, %cst_20 {dimension_numbers = #tpu.dot_dimension_numbers<[1], [0], [0], [1], [0, 0, 1, 1], [], []>} : vector<4x256xf32>, vector<256x144xf32>, vector<4x144xf32> -> vector<4x144xf32>
    %c0_21 = arith.constant 0 : index
    %c0_22 = arith.constant 0 : index
    %33 = vector.load %arg3[%c0_21, %c0_22] : memref<8x4xf32, #tpu.memory_space<vmem>>, vector<8x4xf32>
    %cst_23 = arith.constant dense<0.000000e+00> : vector<8x144xf32>
    %34 = tpu.matmul %33, %30, %cst_23 {dimension_numbers = #tpu.dot_dimension_numbers<[1], [0], [0], [1], [0, 0, 1, 1], [], []>} : vector<8x4xf32>, vector<4x144xf32>, vector<8x144xf32> -> vector<8x144xf32>
    %c0_24 = arith.constant 0 : index
    %c0_25 = arith.constant 0 : index
    %35 = vector.load %arg4[%c0_24, %c0_25] : memref<8x4xf32, #tpu.memory_space<vmem>>, vector<8x4xf32>
    %cst_26 = arith.constant dense<0.000000e+00> : vector<8x144xf32>
    %36 = tpu.matmul %35, %32, %cst_26 {dimension_numbers = #tpu.dot_dimension_numbers<[1], [0], [0], [1], [0, 0, 1, 1], [], []>} : vector<8x4xf32>, vector<4x144xf32>, vector<8x144xf32> -> vector<8x144xf32>
    %37 = arith.addf %34, %36 : vector<8x144xf32>
    %c0_27 = arith.constant 0 : index
    %c0_28 = arith.constant 0 : index
    %38 = vector.load %arg9[%c0_27, %c0_28] : memref<8x8xf32, #tpu.memory_space<vmem>>, vector<8x8xf32>
    %c0_29 = arith.constant 0 : index
    %c0_30 = arith.constant 0 : index
    %39 = vector.load %arg10[%c0_29, %c0_30] : memref<8x1xf32, #tpu.memory_space<vmem>>, vector<8x1xf32>
    %c0_31 = arith.constant 0 : index
    %c0_32 = arith.constant 0 : index
    %40 = vector.load %arg11[%c0_31, %c0_32] : memref<8x1xf32, #tpu.memory_space<vmem>>, vector<8x1xf32>
    %cst_33 = arith.constant dense<0.000000e+00> : vector<8xf32>
    %41 = vector.multi_reduction <add>, %37, %cst_33 [1] : vector<8x144xf32> to vector<8xf32>
    %42 = vector.shape_cast %41 : vector<8xf32> to vector<8x1xf32>
    %cst_34 = arith.constant dense<0.000000e+00> : vector<8x1xf32>
    %43 = tpu.matmul %38, %42, %cst_34 {dimension_numbers = #tpu.dot_dimension_numbers<[1], [0], [0], [1], [0, 0, 1, 1], [], []>} : vector<8x8xf32>, vector<8x1xf32>, vector<8x1xf32> -> vector<8x1xf32>
    %44 = vector.broadcast %43 : vector<8x1xf32> to vector<8x144xf32>
    %45 = arith.subf %37, %44 : vector<8x144xf32>
    %46 = arith.mulf %45, %45 : vector<8x144xf32>
    %cst_35 = arith.constant dense<0.000000e+00> : vector<8xf32>
    %47 = vector.multi_reduction <add>, %46, %cst_35 [1] : vector<8x144xf32> to vector<8xf32>
    %48 = vector.shape_cast %47 : vector<8xf32> to vector<8x1xf32>
    %cst_36 = arith.constant dense<0.000000e+00> : vector<8x1xf32>
    %49 = tpu.matmul %38, %48, %cst_36 {dimension_numbers = #tpu.dot_dimension_numbers<[1], [0], [0], [1], [0, 0, 1, 1], [], []>} : vector<8x8xf32>, vector<8x1xf32>, vector<8x1xf32> -> vector<8x1xf32>
    %cst_37 = arith.constant 9.99999974E-6 : f32
    %50 = vector.broadcast %cst_37 : f32 to vector<8x1xf32>
    %51 = arith.addf %49, %50 : vector<8x1xf32>
    %52 = math.rsqrt %51 : vector<8x1xf32>
    %53 = vector.broadcast %52 : vector<8x1xf32> to vector<8x144xf32>
    %54 = arith.mulf %45, %53 : vector<8x144xf32>
    %55 = vector.broadcast %39 : vector<8x1xf32> to vector<8x144xf32>
    %56 = arith.mulf %54, %55 : vector<8x144xf32>
    %57 = vector.broadcast %40 : vector<8x1xf32> to vector<8x144xf32>
    %58 = arith.addf %56, %57 : vector<8x144xf32>
    %cst_38 = arith.constant 0.000000e+00 : f32
    %59 = vector.broadcast %cst_38 : f32 to vector<8x144xf32>
    %60 = arith.maximumf %58, %59 : vector<8x144xf32>
    %61 = vector.extract_strided_slice %60 {offsets = [0, 0], sizes = [4, 144], strides = [1, 1]} : vector<8x144xf32> to vector<4x144xf32>
    %62 = vector.extract_strided_slice %60 {offsets = [4, 0], sizes = [4, 144], strides = [1, 1]} : vector<8x144xf32> to vector<4x144xf32>
    %c0_39 = arith.constant 0 : index
    %c0_40 = arith.constant 0 : index
    %63 = vector.load %arg14[%c0_39, %c0_40] : memref<144x256xf32, #tpu.memory_space<vmem>>, vector<144x256xf32>
    %cst_41 = arith.constant dense<0.000000e+00> : vector<4x256xf32>
    %64 = tpu.matmul %61, %63, %cst_41 {dimension_numbers = #tpu.dot_dimension_numbers<[1], [0], [0], [1], [0, 0, 1, 1], [], []>} : vector<4x144xf32>, vector<144x256xf32>, vector<4x256xf32> -> vector<4x256xf32>
    %c0_42 = arith.constant 0 : index
    %c0_43 = arith.constant 0 : index
    %65 = vector.load %arg15[%c0_42, %c0_43] : memref<144x256xf32, #tpu.memory_space<vmem>>, vector<144x256xf32>
    %cst_44 = arith.constant dense<0.000000e+00> : vector<4x256xf32>
    %66 = tpu.matmul %62, %65, %cst_44 {dimension_numbers = #tpu.dot_dimension_numbers<[1], [0], [0], [1], [0, 0, 1, 1], [], []>} : vector<4x144xf32>, vector<144x256xf32>, vector<4x256xf32> -> vector<4x256xf32>
    %67 = arith.addf %64, %66 : vector<4x256xf32>
    %c0_45 = arith.constant 0 : index
    %c0_46 = arith.constant 0 : index
    %68 = vector.load %arg5[%c0_45, %c0_46] : memref<8x4xf32, #tpu.memory_space<vmem>>, vector<8x4xf32>
    %69 = arith.addf %28, %67 : vector<4x256xf32>
    %cst_47 = arith.constant dense<0.000000e+00> : vector<8x256xf32>
    %70 = tpu.matmul %68, %69, %cst_47 {dimension_numbers = #tpu.dot_dimension_numbers<[1], [0], [0], [1], [0, 0, 1, 1], [], []>} : vector<8x4xf32>, vector<4x256xf32>, vector<8x256xf32> -> vector<8x256xf32>
    %71 = arith.addf %70, %5 : vector<8x256xf32>
    %c0_48 = arith.constant 0 : index
    %c0_49 = arith.constant 0 : index
    %72 = vector.load %arg16[%c0_48, %c0_49] : memref<16x256xf32, #tpu.memory_space<vmem>>, vector<8x256xf32>
    tpu.vector_store %arg16[%c0_48, %c0_49], %3 {strides = array<i32>} : memref<16x256xf32, #tpu.memory_space<vmem>>, vector<8x256xf32>,
    %c8 = arith.constant 8 : index
    %c0_50 = arith.constant 0 : index
    %73 = vector.load %arg16[%c8, %c0_50] : memref<16x256xf32, #tpu.memory_space<vmem>>, vector<8x256xf32>
    tpu.vector_store %arg16[%c8, %c0_50], %71 {strides = array<i32>} : memref<16x256xf32, #tpu.memory_space<vmem>>, vector<8x256xf32>,
    return
  }
  func.func @transform_0(%arg0: i32) -> (i32, i32) {
    %c0_i32 = arith.constant 0 : i32
    %c0_i32_0 = arith.constant 0 : i32
    %c0_i32_1 = arith.constant 0 : i32
    return %c0_i32, %c0_i32_0 : i32, i32
  }
  func.func @transform_1(%arg0: i32) -> (i32, i32) {
    %c0_i32 = arith.constant 0 : i32
    %c0_i32_0 = arith.constant 0 : i32
    %c0_i32_1 = arith.constant 0 : i32
    return %c0_i32, %c0_i32_0 : i32, i32
  }
  func.func @transform_2(%arg0: i32) -> (i32, i32) {
    %c0_i32 = arith.constant 0 : i32
    %c0_i32_0 = arith.constant 0 : i32
    %c0_i32_1 = arith.constant 0 : i32
    return %c0_i32, %c0_i32_0 : i32, i32
  }
  func.func @transform_3(%arg0: i32) -> (i32, i32) {
    %c0_i32 = arith.constant 0 : i32
    %c0_i32_0 = arith.constant 0 : i32
    %c0_i32_1 = arith.constant 0 : i32
    return %c0_i32, %c0_i32_0 : i32, i32
  }
  func.func @transform_4(%arg0: i32) -> (i32, i32) {
    %c0_i32 = arith.constant 0 : i32
    %c0_i32_0 = arith.constant 0 : i32
    %c0_i32_1 = arith.constant 0 : i32
    return %c0_i32, %c0_i32_0 : i32, i32
  }
  func.func @transform_5(%arg0: i32) -> (i32, i32) {
    %c0_i32 = arith.constant 0 : i32
    %c0_i32_0 = arith.constant 0 : i32
    %c0_i32_1 = arith.constant 0 : i32
    return %c0_i32, %c0_i32_0 : i32, i32
  }
  func.func @transform_6(%arg0: i32) -> (i32, i32) {
    %c0_i32 = arith.constant 0 : i32
    %c0_i32_0 = arith.constant 0 : i32
    %c0_i32_1 = arith.constant 0 : i32
    return %c0_i32, %c0_i32_0 : i32, i32
  }
  func.func @transform_7(%arg0: i32) -> (i32, i32) {
    %c0_i32 = arith.constant 0 : i32
    %c0_i32_0 = arith.constant 0 : i32
    %c0_i32_1 = arith.constant 0 : i32
    return %c0_i32, %c0_i32_0 : i32, i32
  }
  func.func @transform_8(%arg0: i32) -> (i32, i32) {
    %c0_i32 = arith.constant 0 : i32
    %c0_i32_0 = arith.constant 0 : i32
    %c0_i32_1 = arith.constant 0 : i32
    return %c0_i32, %c0_i32_0 : i32, i32
  }
  func.func @transform_9(%arg0: i32) -> (i32, i32) {
    %c0_i32 = arith.constant 0 : i32
    %c0_i32_0 = arith.constant 0 : i32
    %c0_i32_1 = arith.constant 0 : i32
    return %c0_i32, %c0_i32_0 : i32, i32
  }
  func.func @transform_10(%arg0: i32) -> (i32, i32) {
    %c0_i32 = arith.constant 0 : i32
    %c0_i32_0 = arith.constant 0 : i32
    %c0_i32_1 = arith.constant 0 : i32
    return %c0_i32, %c0_i32_0 : i32, i32
  }
  func.func @transform_11(%arg0: i32) -> (i32, i32) {
    %c0_i32 = arith.constant 0 : i32
    %c0_i32_0 = arith.constant 0 : i32
    %c0_i32_1 = arith.constant 0 : i32
    return %c0_i32, %c0_i32_0 : i32, i32
  }
  func.func @transform_12(%arg0: i32) -> (i32, i32) {
    %c0_i32 = arith.constant 0 : i32
    %c0_i32_0 = arith.constant 0 : i32
    %c0_i32_1 = arith.constant 0 : i32
    return %c0_i32, %c0_i32_0 : i32, i32
  }
  func.func @transform_13(%arg0: i32) -> (i32, i32) {
    %c0_i32 = arith.constant 0 : i32
    %c0_i32_0 = arith.constant 0 : i32
    %c0_i32_1 = arith.constant 0 : i32
    return %c0_i32, %c0_i32_0 : i32, i32
  }
  func.func @transform_14(%arg0: i32) -> (i32, i32) {
    %c0_i32 = arith.constant 0 : i32
    %c0_i32_0 = arith.constant 0 : i32
    %c0_i32_1 = arith.constant 0 : i32
    return %c0_i32, %c0_i32_0 : i32, i32
  }
  func.func @transform_15(%arg0: i32) -> (i32, i32) {
    %c0_i32 = arith.constant 0 : i32
    %c0_i32_0 = arith.constant 0 : i32
    %c0_i32_1 = arith.constant 0 : i32
    return %c0_i32, %c0_i32_0 : i32, i32
  }
}

</mosaic_0001>

<llo_original>
// kernel: ffc_forward.1
$region0: #{ffc_forward.1}
  #allocation0 [shape = 'u32[]', space=smem, size = 0x4, offset = 0x4, fixed_abs, tag = 'smem constant byte address 0x4 - core index']
  #allocation1 [shape = 'u32[144,128]{1,0:T(1,128)}', space=vmem, size = 0x12000, scoped, tag = 'internal scratch']
  %s0 = inlined_call_operand.vmem [shape: f32[8,256], index: 0, kind: input, shape index: {}]
  %s1 = inlined_call_operand.vmem [shape: f32[20,8], index: 1, kind: input, shape index: {}]
  %s2 = inlined_call_operand.vmem [shape: f32[8,4], index: 2, kind: input, shape index: {}]
  %s3 = inlined_call_operand.vmem [shape: f32[8,4], index: 3, kind: input, shape index: {}]
  %s4 = inlined_call_operand.vmem [shape: f32[8,4], index: 4, kind: input, shape index: {}]
  %s5 = inlined_call_operand.vmem [shape: f32[4,4], index: 5, kind: input, shape index: {}]
  %s6 = inlined_call_operand.vmem [shape: f32[4,1], index: 6, kind: input, shape index: {}]
  %s7 = inlined_call_operand.vmem [shape: f32[4,1], index: 7, kind: input, shape index: {}]
  %s8 = inlined_call_operand.vmem [shape: f32[8,8], index: 8, kind: input, shape index: {}]
  %s9 = inlined_call_operand.vmem [shape: f32[8,1], index: 9, kind: input, shape index: {}]
  %s10 = inlined_call_operand.vmem [shape: f32[8,1], index: 10, kind: input, shape index: {}]
  %s11 = inlined_call_operand.vmem [shape: f32[256,144], index: 11, kind: input, shape index: {}]
  %s12 = inlined_call_operand.vmem [shape: f32[256,144], index: 12, kind: input, shape index: {}]
  %s13 = inlined_call_operand.vmem [shape: f32[144,256], index: 13, kind: input, shape index: {}]
  %s14 = inlined_call_operand.vmem [shape: f32[144,256], index: 14, kind: input, shape index: {}]
  %s15 = inlined_call_operand.vmem [shape: f32[16,256], index: 15, kind: output, shape index: {}]
  %s16 = sld [smem:[#allocation0]]
  $region70: #{ffc_forward.1} parent=0
    _
  %s18 = ssub.s32 1, %s16
  %s19 = scalar_select 0, %s18, %s16
  // Predicated region
  $region2: #{ffc_forward.1} parent=0 // pred_check
    _
  $region3: #{ffc_forward.1} parent=0 // pred_check_branch
    %21 = sbr.rel (0) target = $region5
  $region4: #{ffc_forward.1} parent=0 // pred_region
    _
  $region5: #{ffc_forward.1} parent=0 // pred_fallthru
    _
  // Predicated region
  $region6: #{ffc_forward.1} parent=0 // pred_check
    _
  $region7: #{ffc_forward.1} parent=0 // pred_check_branch
    %23 = sbr.rel (0) target = $region9
  $region8: #{ffc_forward.1} parent=0 // pred_region
    _
  $region9: #{ffc_forward.1} parent=0 // pred_fallthru
    _
  // Predicated region
  $region10: #{ffc_forward.1} parent=0 // pred_check
    _
  $region11: #{ffc_forward.1} parent=0 // pred_check_branch
    %25 = sbr.rel (0) target = $region13
  $region12: #{ffc_forward.1} parent=0 // pred_region
    _
  $region13: #{ffc_forward.1} parent=0 // pred_fallthru
    _
  // Predicated region
  $region14: #{ffc_forward.1} parent=0 // pred_check
    _
  $region15: #{ffc_forward.1} parent=0 // pred_check_branch
    %27 = sbr.rel (0) target = $region17
  $region16: #{ffc_forward.1} parent=0 // pred_region
    _
  $region17: #{ffc_forward.1} parent=0 // pred_fallthru
    _
  // Predicated region
  $region18: #{ffc_forward.1} parent=0 // pred_check
    _
  $region19: #{ffc_forward.1} parent=0 // pred_check_branch
    %29 = sbr.rel (0) target = $region21
  $region20: #{ffc_forward.1} parent=0 // pred_region
    _
  $region21: #{ffc_forward.1} parent=0 // pred_fallthru
    _
  // Predicated region
  $region22: #{ffc_forward.1} parent=0 // pred_check
    _
  $region23: #{ffc_forward.1} parent=0 // pred_check_branch
    %31 = sbr.rel (0) target = $region25
  $region24: #{ffc_forward.1} parent=0 // pred_region
    _
  $region25: #{ffc_forward.1} parent=0 // pred_fallthru
    _
  // Predicated region
  $region26: #{ffc_forward.1} parent=0 // pred_check
    _
  $region27: #{ffc_forward.1} parent=0 // pred_check_branch
    %33 = sbr.rel (0) target = $region29
  $region28: #{ffc_forward.1} parent=0 // pred_region
    _
  $region29: #{ffc_forward.1} parent=0 // pred_fallthru
    _
  // Predicated region
  $region30: #{ffc_forward.1} parent=0 // pred_check
    _
  $region31: #{ffc_forward.1} parent=0 // pred_check_branch
    %35 = sbr.rel (0) target = $region33
  $region32: #{ffc_forward.1} parent=0 // pred_region
    _
  $region33: #{ffc_forward.1} parent=0 // pred_fallthru
    _
  // Predicated region
  $region34: #{ffc_forward.1} parent=0 // pred_check
    _
  $region35: #{ffc_forward.1} parent=0 // pred_check_branch
    %37 = sbr.rel (0) target = $region37
  $region36: #{ffc_forward.1} parent=0 // pred_region
    _
  $region37: #{ffc_forward.1} parent=0 // pred_fallthru
    _
  // Predicated region
  $region38: #{ffc_forward.1} parent=0 // pred_check
    _
  $region39: #{ffc_forward.1} parent=0 // pred_check_branch
    %39 = sbr.rel (0) target = $region41
  $region40: #{ffc_forward.1} parent=0 // pred_region
    _
  $region41: #{ffc_forward.1} parent=0 // pred_fallthru
    _
  // Predicated region
  $region42: #{ffc_forward.1} parent=0 // pred_check
    _
  $region43: #{ffc_forward.1} parent=0 // pred_check_branch
    %41 = sbr.rel (0) target = $region45
  $region44: #{ffc_forward.1} parent=0 // pred_region
    _
  $region45: #{ffc_forward.1} parent=0 // pred_fallthru
    _
  // Predicated region
  $region46: #{ffc_forward.1} parent=0 // pred_check
    _
  $region47: #{ffc_forward.1} parent=0 // pred_check_branch
    %43 = sbr.rel (0) target = $region49
  $region48: #{ffc_forward.1} parent=0 // pred_region
    _
  $region49: #{ffc_forward.1} parent=0 // pred_fallthru
    _
  // Predicated region
  $region50: #{ffc_forward.1} parent=0 // pred_check
    _
  $region51: #{ffc_forward.1} parent=0 // pred_check_branch
    %45 = sbr.rel (0) target = $region53
  $region52: #{ffc_forward.1} parent=0 // pred_region
    _
  $region53: #{ffc_forward.1} parent=0 // pred_fallthru
    _
  // Predicated region
  $region54: #{ffc_forward.1} parent=0 // pred_check
    _
  $region55: #{ffc_forward.1} parent=0 // pred_check_branch
    %47 = sbr.rel (0) target = $region57
  $region56: #{ffc_forward.1} parent=0 // pred_region
    _
  $region57: #{ffc_forward.1} parent=0 // pred_fallthru
    _
  // Predicated region
  $region58: #{ffc_forward.1} parent=0 // pred_check
    _
  $region59: #{ffc_forward.1} parent=0 // pred_check_branch
    %49 = sbr.rel (0) target = $region61
  $region60: #{ffc_forward.1} parent=0 // pred_region
    _
  $region61: #{ffc_forward.1} parent=0 // pred_fallthru
    _
  %v50 = vld [vmem:[%s0] sm:$0xff]
  %v51 = vld [vmem:[%s0 + $0x8] sm:$0xff]
  %v52 = vld [vmem:[%s1] sm:$0xff]
  %v53 = vld [vmem:[%s1 + $0x8] sm:$0xff]
  %v54 = vld [vmem:[%s1 + $0x10] sm:$0xf]
  %vm55 = vcmask 64512
  %v57 = vsel %vm55, %v52, 0
  %v60 = vsel %vm55, %v53, 0
  %v63 = vsel %vm55, %v54, 0
  %65 = vmatprep.subr.mxu0 0.0
  %66 = vmatpush1.msra.mxu0 0.0
  %67 = vmatprep.subr.mxu0 0.0
  %68 = vmatpush1.msra.mxu0 0.0
  %69 = vmatprep.subr.mxu0 0.0
  %70 = vmatpush1.msra.mxu0 0.0
  %71 = vmatprep.subr.mxu0 0.0
  %72 = vmatpush1.msra.mxu0 0.0
  %73 = vmatprep.subr.mxu0 0.0
  %74 = vmatpush1.msra.mxu0 0.0
  %75 = vmatprep.subr.mxu0 0.0
  %76 = vmatpush1.msra.mxu0 0.0
  %77 = vmatprep.subr.mxu0 0.0
  %78 = vmatpush1.msra.mxu0 0.0
  %79 = vmatprep.subr.mxu0 0.0
  %80 = vmatpush1.msra.mxu0 0.0
  %81 = vmatprep.subr.mxu0 0.0
  %82 = vmatpush1.msra.mxu0 0.0
  %83 = vmatprep.subr.mxu0 0.0
  %84 = vmatpush1.msra.mxu0 0.0
  %85 = vmatprep.subr.mxu0 0.0
  %86 = vmatpush1.msra.mxu0 0.0
  %87 = vmatprep.subr.mxu0 0.0
  %88 = vmatpush1.msra.mxu0 0.0
  %89 = vmatprep.subr.mxu0 0.0
  %90 = vmatpush1.msra.mxu0 0.0
  %91 = vmatprep.subr.mxu0 0.0
  %92 = vmatpush1.msra.mxu0 0.0
  %93 = vmatprep.subr.mxu0 0.0
  %94 = vmatpush1.msra.mxu0 0.0
  %95 = vmatprep.subr.mxu0 %v51
  %96 = vmatpush1.msra.mxu0 %v50
  %97 = vmatprep.subr.mxu0 0.0
  %98 = vmatpush2.msra.mxu0 0.0
  %99 = vmatprep.subr.mxu0 0.0
  %100 = vmatpush2.msra.mxu0 0.0
  %101 = vmatprep.subr.mxu0 0.0
  %102 = vmatpush2.msra.mxu0 0.0
  %103 = vmatprep.subr.mxu0 0.0
  %104 = vmatpush2.msra.mxu0 0.0
  %105 = vmatprep.subr.mxu0 0.0
  %106 = vmatpush2.msra.mxu0 0.0
  %107 = vmatprep.subr.mxu0 0.0
  %108 = vmatpush2.msra.mxu0 0.0
  %109 = vmatprep.subr.mxu0 0.0
  %110 = vmatpush2.msra.mxu0 0.0
  %111 = vmatprep.subr.mxu0 0.0
  %112 = vmatpush2.msra.mxu0 0.0
  %113 = vmatprep.subr.mxu0 0.0
  %114 = vmatpush2.msra.mxu0 0.0
  %115 = vmatprep.subr.mxu0 0.0
  %116 = vmatpush2.msra.mxu0 0.0
  %117 = vmatprep.subr.mxu0 0.0
  %118 = vmatpush2.msra.mxu0 0.0
  %119 = vmatprep.subr.mxu0 0.0
  %120 = vmatpush2.msra.mxu0 0.0
  %121 = vmatprep.subr.mxu0 0.0
  %122 = vmatpush2.msra.mxu0 0.0
  %123 = vmatprep.subr.mxu0 0.0
  %124 = vmatpush2.msra.mxu0 0.0
  %125 = vmatprep.subr.mxu0 0.0
  %126 = vmatpush2.msra.mxu0 0.0
  %127 = vmatprep.subr.mxu0 0.0
  %128 = vmatpush2.msra.mxu0 0.0
  %129 = vmatprep.mubr.f32.mxu0 0.0
  %130 = vmatmul.mubr.f32.gmra.mxu0 %v57
  %v131 = vpop.f32.mrf.mxu0
  %v132 = vadd.f32 0.0, %v131
  %v133 = vpop.f32.mrf.mxu0
  %v134 = vadd.f32 0.0, %v133
  %135 = vmatprep.mubr.f32.mxu0 0.0
  %136 = vmatmul.mubr.f32.gmra.mxu0 %v60
  %v137 = vpop.f32.mrf.mxu0
  %v138 = vadd.f32 0.0, %v137
  %v139 = vpop.f32.mrf.mxu0
  %v140 = vadd.f32 0.0, %v139
  %141 = vmatprep.mubr.f32.mxu0 0.0
  %142 = vmatmul.mubr.f32.gmra.mxu0 %v63
  %v143 = vpop.f32.mrf.mxu0
  %v144 = vadd.f32 0.0, %v143
  %v145 = vpop.f32.mrf.mxu0
  %v146 = vadd.f32 0.0, %v145
  %147 = vdwg.mxu0
  %v148 = vld [vmem:[%s5] sm:$0xf]
  %v149 = vld [vmem:[%s6] sm:$0xf]
  %v150 = vld [vmem:[%s7] sm:$0xf]
  %vm151 = vcmask 1043456
  %v152 = vsel %vm151, %v138, 0.0
  %v153 = vsel %vm151, %v140, 0.0
  %v154 = vadd.f32 %v152, %v153
  %155 = vadd.xlane.f32.xlu0 %v154
  %v156 = vpop.xlane.xlu0 %155
  %vm157 = vcmask 31744
  %v159 = vsel %vm157, %v148, 0
  %v162 = vsel %vm151, %v156, 0
  %164 = vmatprep.subr.mxu0 0.0
  %165 = vmatpush1.msra.mxu0 0.0
  %166 = vmatprep.subr.mxu0 0.0
  %167 = vmatpush1.msra.mxu0 0.0
  %168 = vmatprep.subr.mxu0 0.0
  %169 = vmatpush1.msra.mxu0 0.0
  %170 = vmatprep.subr.mxu0 0.0
  %171 = vmatpush1.msra.mxu0 0.0
  %172 = vmatprep.subr.mxu0 0.0
  %173 = vmatpush1.msra.mxu0 0.0
  %174 = vmatprep.subr.mxu0 0.0
  %175 = vmatpush1.msra.mxu0 0.0
  %176 = vmatprep.subr.mxu0 0.0
  %177 = vmatpush1.msra.mxu0 0.0
  %178 = vmatprep.subr.mxu0 0.0
  %179 = vmatpush1.msra.mxu0 0.0
  %180 = vmatprep.subr.mxu0 0.0
  %181 = vmatpush1.msra.mxu0 0.0
  %182 = vmatprep.subr.mxu0 0.0
  %183 = vmatpush1.msra.mxu0 0.0
  %184 = vmatprep.subr.mxu0 0.0
  %185 = vmatpush1.msra.mxu0 0.0
  %186 = vmatprep.subr.mxu0 0.0
  %187 = vmatpush1.msra.mxu0 0.0
  %188 = vmatprep.subr.mxu0 0.0
  %189 = vmatpush1.msra.mxu0 0.0
  %190 = vmatprep.subr.mxu0 0.0
  %191 = vmatpush1.msra.mxu0 0.0
  %192 = vmatprep.subr.mxu0 0.0
  %193 = vmatpush1.msra.mxu0 0.0
  %194 = vmatprep.subr.mxu0 0.0
  %195 = vmatpush1.msra.mxu0 %v162
  %196 = vmatprep.subr.mxu0 0.0
  %197 = vmatpush2.msra.mxu0 0.0
  %198 = vmatprep.subr.mxu0 0.0
  %199 = vmatpush2.msra.mxu0 0.0
  %200 = vmatprep.subr.mxu0 0.0
  %201 = vmatpush2.msra.mxu0 0.0
  %202 = vmatprep.subr.mxu0 0.0
  %203 = vmatpush2.msra.mxu0 0.0
  %204 = vmatprep.subr.mxu0 0.0
  %205 = vmatpush2.msra.mxu0 0.0
  %206 = vmatprep.subr.mxu0 0.0
  %207 = vmatpush2.msra.mxu0 0.0
  %208 = vmatprep.subr.mxu0 0.0
  %209 = vmatpush2.msra.mxu0 0.0
  %210 = vmatprep.subr.mxu0 0.0
  %211 = vmatpush2.msra.mxu0 0.0
  %212 = vmatprep.subr.mxu0 0.0
  %213 = vmatpush2.msra.mxu0 0.0
  %214 = vmatprep.subr.mxu0 0.0
  %215 = vmatpush2.msra.mxu0 0.0
  %216 = vmatprep.subr.mxu0 0.0
  %217 = vmatpush2.msra.mxu0 0.0
  %218 = vmatprep.subr.mxu0 0.0
  %219 = vmatpush2.msra.mxu0 0.0
  %220 = vmatprep.subr.mxu0 0.0
  %221 = vmatpush2.msra.mxu0 0.0
  %222 = vmatprep.subr.mxu0 0.0
  %223 = vmatpush2.msra.mxu0 0.0
  %224 = vmatprep.subr.mxu0 0.0
  %225 = vmatpush2.msra.mxu0 0.0
  %226 = vmatprep.subr.mxu0 0.0
  %227 = vmatpush2.msra.mxu0 0.0
  %228 = vmatprep.mubr.f32.mxu0 0.0
  %229 = vmatmul.mubr.f32.gmra.mxu0 %v159
  %v230 = vpop.f32.mrf.mxu0
  %v231 = vadd.f32 0.0, %v230
  %v232 = vpop.f32.mrf.mxu0
  %233 = vdwg.mxu0
  %235 = vset.pattern.permute.xlu0 0
  %236 = vperm.xlu0 %235, %v231
  %v237 = vpop.permute.xlu0 %236
  %v239 = vsub.f32 %v138, %v237
  %v240 = vsub.f32 %v140, %v237
  %v241 = vmul.f32 %v239, %v239
  %v242 = vmul.f32 %v240, %v240
  %v243 = vsel %vm151, %v241, 0.0
  %v244 = vsel %vm151, %v242, 0.0
  %v245 = vadd.f32 %v243, %v244
  %246 = vadd.xlane.f32.xlu0 %v245
  %v247 = vpop.xlane.xlu0 %246
  %v249 = vsel %vm151, %v247, 0
  %251 = vmatprep.subr.mxu0 0.0
  %252 = vmatpush1.msra.mxu0 0.0
  %253 = vmatprep.subr.mxu0 0.0
  %254 = vmatpush1.msra.mxu0 0.0
  %255 = vmatprep.subr.mxu0 0.0
  %256 = vmatpush1.msra.mxu0 0.0
  %257 = vmatprep.subr.mxu0 0.0
  %258 = vmatpush1.msra.mxu0 0.0
  %259 = vmatprep.subr.mxu0 0.0
  %260 = vmatpush1.msra.mxu0 0.0
  %261 = vmatprep.subr.mxu0 0.0
  %262 = vmatpush1.msra.mxu0 0.0
  %263 = vmatprep.subr.mxu0 0.0
  %264 = vmatpush1.msra.mxu0 0.0
  %265 = vmatprep.subr.mxu0 0.0
  %266 = vmatpush1.msra.mxu0 0.0
  %267 = vmatprep.subr.mxu0 0.0
  %268 = vmatpush1.msra.mxu0 0.0
  %269 = vmatprep.subr.mxu0 0.0
  %270 = vmatpush1.msra.mxu0 0.0
  %271 = vmatprep.subr.mxu0 0.0
  %272 = vmatpush1.msra.mxu0 0.0
  %273 = vmatprep.subr.mxu0 0.0
  %274 = vmatpush1.msra.mxu0 0.0
  %275 = vmatprep.subr.mxu0 0.0
  %276 = vmatpush1.msra.mxu0 0.0
  %277 = vmatprep.subr.mxu0 0.0
  %278 = vmatpush1.msra.mxu0 0.0
  %279 = vmatprep.subr.mxu0 0.0
  %280 = vmatpush1.msra.mxu0 0.0
  %281 = vmatprep.subr.mxu0 0.0
  %282 = vmatpush1.msra.mxu0 %v249
  %283 = vmatprep.subr.mxu0 0.0
  %284 = vmatpush2.msra.mxu0 0.0
  %285 = vmatprep.subr.mxu0 0.0
  %286 = vmatpush2.msra.mxu0 0.0
  %287 = vmatprep.subr.mxu0 0.0
  %288 = vmatpush2.msra.mxu0 0.0
  %289 = vmatprep.subr.mxu0 0.0
  %290 = vmatpush2.msra.mxu0 0.0
  %291 = vmatprep.subr.mxu0 0.0
  %292 = vmatpush2.msra.mxu0 0.0
  %293 = vmatprep.subr.mxu0 0.0
  %294 = vmatpush2.msra.mxu0 0.0
  %295 = vmatprep.subr.mxu0 0.0
  %296 = vmatpush2.msra.mxu0 0.0
  %297 = vmatprep.subr.mxu0 0.0
  %298 = vmatpush2.msra.mxu0 0.0
  %299 = vmatprep.subr.mxu0 0.0
  %300 = vmatpush2.msra.mxu0 0.0
  %301 = vmatprep.subr.mxu0 0.0
  %302 = vmatpush2.msra.mxu0 0.0
  %303 = vmatprep.subr.mxu0 0.0
  %304 = vmatpush2.msra.mxu0 0.0
  %305 = vmatprep.subr.mxu0 0.0
  %306 = vmatpush2.msra.mxu0 0.0
  %307 = vmatprep.subr.mxu0 0.0
  %308 = vmatpush2.msra.mxu0 0.0
  %309 = vmatprep.subr.mxu0 0.0
  %310 = vmatpush2.msra.mxu0 0.0
  %311 = vmatprep.subr.mxu0 0.0
  %312 = vmatpush2.msra.mxu0 0.0
  %313 = vmatprep.subr.mxu0 0.0
  %314 = vmatpush2.msra.mxu0 0.0
  %315 = vmatprep.mubr.f32.mxu0 0.0
  %316 = vmatmul.mubr.f32.gmra.mxu0 %v159
  %v317 = vpop.f32.mrf.mxu0
  %v318 = vadd.f32 1e-05, %v317
  %v319 = vpop.f32.mrf.mxu0
  %320 = vdwg.mxu0
  %v321 = vrsqrt.pop %v318
  %323 = vset.pattern.permute.xlu0 0
  %324 = vperm.xlu0 %323, %v321
  %v325 = vpop.permute.xlu0 %324
  %v327 = vmul.f32 %v239, %v325
  %v328 = vmul.f32 %v240, %v325
  %330 = vset.pattern.permute.xlu0 0
  %331 = vperm.xlu0 %330, %v149
  %v332 = vpop.permute.xlu0 %331
  %v334 = vmul.f32 %v327, %v332
  %v335 = vmul.f32 %v328, %v332
  %337 = vset.pattern.permute.xlu0 0
  %338 = vperm.xlu0 %337, %v150
  %v339 = vpop.permute.xlu0 %338
  %v341 = vadd.f32 %v334, %v339
  %v342 = vadd.f32 %v335, %v339
  %v343 = vmax.f32 %v341, 0.0
  %v344 = vmax.f32 %v342, 0.0
  %v345 = vld [vmem:[%s11] sm:$0xff]
  %v346 = vld [vmem:[%s11 + $0x8] sm:$0xff]
  %v347 = vld [vmem:[%s11 + $0x10] sm:$0xff]
  %v348 = vld [vmem:[%s11 + $0x18] sm:$0xff]
  %v349 = vld [vmem:[%s11 + $0x20] sm:$0xff]
  %v350 = vld [vmem:[%s11 + $0x28] sm:$0xff]
  %v351 = vld [vmem:[%s11 + $0x30] sm:$0xff]
  %v352 = vld [vmem:[%s11 + $0x38] sm:$0xff]
  %v353 = vld [vmem:[%s11 + $0x40] sm:$0xff]
  %v354 = vld [vmem:[%s11 + $0x48] sm:$0xff]
  %v355 = vld [vmem:[%s11 + $0x50] sm:$0xff]
  %v356 = vld [vmem:[%s11 + $0x58] sm:$0xff]
  %v357 = vld [vmem:[%s11 + $0x60] sm:$0xff]
  %v358 = vld [vmem:[%s11 + $0x68] sm:$0xff]
  %v359 = vld [vmem:[%s11 + $0x70] sm:$0xff]
  %v360 = vld [vmem:[%s11 + $0x78] sm:$0xff]
  %v361 = vld [vmem:[%s11 + $0x80] sm:$0xff]
  %v362 = vld [vmem:[%s11 + $0x88] sm:$0xff]
  %v363 = vld [vmem:[%s11 + $0x90] sm:$0xff]
  %v364 = vld [vmem:[%s11 + $0x98] sm:$0xff]
  %v365 = vld [vmem:[%s11 + $0xa0] sm:$0xff]
  %v366 = vld [vmem:[%s11 + $0xa8] sm:$0xff]
  %v367 = vld [vmem:[%s11 + $0xb0] sm:$0xff]
  %v368 = vld [vmem:[%s11 + $0xb8] sm:$0xff]
  %v369 = vld [vmem:[%s11 + $0xc0] sm:$0xff]
  %v370 = vld [vmem:[%s11 + $0xc8] sm:$0xff]
  %v371 = vld [vmem:[%s11 + $0xd0] sm:$0xff]
  %v372 = vld [vmem:[%s11 + $0xd8] sm:$0xff]
  %v373 = vld [vmem:[%s11 + $0xe0] sm:$0xff]
  %v374 = vld [vmem:[%s11 + $0xe8] sm:$0xff]
  %v375 = vld [vmem:[%s11 + $0xf0] sm:$0xff]
  %v376 = vld [vmem:[%s11 + $0xf8] sm:$0xff]
  %v377 = vld [vmem:[%s11 + $0x100] sm:$0xff]
  %v378 = vld [vmem:[%s11 + $0x108] sm:$0xff]
  %v379 = vld [vmem:[%s11 + $0x110] sm:$0xff]
  %v380 = vld [vmem:[%s11 + $0x118] sm:$0xff]
  %v381 = vld [vmem:[%s11 + $0x120] sm:$0xff]
  %v382 = vld [vmem:[%s11 + $0x128] sm:$0xff]
  %v383 = vld [vmem:[%s11 + $0x130] sm:$0xff]
  %v384 = vld [vmem:[%s11 + $0x138] sm:$0xff]
  %v385 = vld [vmem:[%s11 + $0x140] sm:$0xff]
  %v386 = vld [vmem:[%s11 + $0x148] sm:$0xff]
  %v387 = vld [vmem:[%s11 + $0x150] sm:$0xff]
  %v388 = vld [vmem:[%s11 + $0x158] sm:$0xff]
  %v389 = vld [vmem:[%s11 + $0x160] sm:$0xff]
  %v390 = vld [vmem:[%s11 + $0x168] sm:$0xff]
  %v391 = vld [vmem:[%s11 + $0x170] sm:$0xff]
  %v392 = vld [vmem:[%s11 + $0x178] sm:$0xff]
  %v393 = vld [vmem:[%s11 + $0x180] sm:$0xff]
  %v394 = vld [vmem:[%s11 + $0x188] sm:$0xff]
  %v395 = vld [vmem:[%s11 + $0x190] sm:$0xff]
  %v396 = vld [vmem:[%s11 + $0x198] sm:$0xff]
  %v397 = vld [vmem:[%s11 + $0x1a0] sm:$0xff]
  %v398 = vld [vmem:[%s11 + $0x1a8] sm:$0xff]
  %v399 = vld [vmem:[%s11 + $0x1b0] sm:$0xff]
  %v400 = vld [vmem:[%s11 + $0x1b8] sm:$0xff]
  %v401 = vld [vmem:[%s11 + $0x1c0] sm:$0xff]
  %v402 = vld [vmem:[%s11 + $0x1c8] sm:$0xff]
  %v403 = vld [vmem:[%s11 + $0x1d0] sm:$0xff]
  %v404 = vld [vmem:[%s11 + $0x1d8] sm:$0xff]
  %v405 = vld [vmem:[%s11 + $0x1e0] sm:$0xff]
  %v406 = vld [vmem:[%s11 + $0x1e8] sm:$0xff]
  %v407 = vld [vmem:[%s11 + $0x1f0] sm:$0xff]
  %v408 = vld [vmem:[%s11 + $0x1f8] sm:$0xff]
  %409 = vmatprep.subr.mxu0 %v376
  %410 = vmatpush1.msra.mxu0 %v375
  %411 = vmatprep.subr.mxu0 %v374
  %412 = vmatpush1.msra.mxu0 %v373
  %413 = vmatprep.subr.mxu0 %v372
  %414 = vmatpush1.msra.mxu0 %v371
  %415 = vmatprep.subr.mxu0 %v370
  %416 = vmatpush1.msra.mxu0 %v369
  %417 = vmatprep.subr.mxu0 %v368
  %418 = vmatpush1.msra.mxu0 %v367
  %419 = vmatprep.subr.mxu0 %v366
  %420 = vmatpush1.msra.mxu0 %v365
  %421 = vmatprep.subr.mxu0 %v364
  %422 = vmatpush1.msra.mxu0 %v363
  %423 = vmatprep.subr.mxu0 %v362
  %424 = vmatpush1.msra.mxu0 %v361
  %425 = vmatprep.subr.mxu0 %v360
  %426 = vmatpush1.msra.mxu0 %v359
  %427 = vmatprep.subr.mxu0 %v358
  %428 = vmatpush1.msra.mxu0 %v357
  %429 = vmatprep.subr.mxu0 %v356
  %430 = vmatpush1.msra.mxu0 %v355
  %431 = vmatprep.subr.mxu0 %v354
  %432 = vmatpush1.msra.mxu0 %v353
  %433 = vmatprep.subr.mxu0 %v352
  %434 = vmatpush1.msra.mxu0 %v351
  %435 = vmatprep.subr.mxu0 %v350
  %436 = vmatpush1.msra.mxu0 %v349
  %437 = vmatprep.subr.mxu0 %v348
  %438 = vmatpush1.msra.mxu0 %v347
  %439 = vmatprep.subr.mxu0 %v346
  %440 = vmatpush1.msra.mxu0 %v345
  %441 = vmatprep.subr.mxu0 %v408
  %442 = vmatpush2.msra.mxu0 %v407
  %443 = vmatprep.subr.mxu0 %v406
  %444 = vmatpush2.msra.mxu0 %v405
  %445 = vmatprep.subr.mxu0 %v404
  %446 = vmatpush2.msra.mxu0 %v403
  %447 = vmatprep.subr.mxu0 %v402
  %448 = vmatpush2.msra.mxu0 %v401
  %449 = vmatprep.subr.mxu0 %v400
  %450 = vmatpush2.msra.mxu0 %v399
  %451 = vmatprep.subr.mxu0 %v398
  %452 = vmatpush2.msra.mxu0 %v397
  %453 = vmatprep.subr.mxu0 %v396
  %454 = vmatpush2.msra.mxu0 %v395
  %455 = vmatprep.subr.mxu0 %v394
  %456 = vmatpush2.msra.mxu0 %v393
  %457 = vmatprep.subr.mxu0 %v392
  %458 = vmatpush2.msra.mxu0 %v391
  %459 = vmatprep.subr.mxu0 %v390
  %460 = vmatpush2.msra.mxu0 %v389
  %461 = vmatprep.subr.mxu0 %v388
  %462 = vmatpush2.msra.mxu0 %v387
  %463 = vmatprep.subr.mxu0 %v386
  %464 = vmatpush2.msra.mxu0 %v385
  %465 = vmatprep.subr.mxu0 %v384
  %466 = vmatpush2.msra.mxu0 %v383
  %467 = vmatprep.subr.mxu0 %v382
  %468 = vmatpush2.msra.mxu0 %v381
  %469 = vmatprep.subr.mxu0 %v380
  %470 = vmatpush2.msra.mxu0 %v379
  %471 = vmatprep.subr.mxu0 %v378
  %472 = vmatpush2.msra.mxu0 %v377
  %473 = vmatprep.mubr.f32.mxu0 %v344
  %474 = vmatmul.mubr.f32.gmra.mxu0 %v343
  %v475 = vpop.f32.mrf.mxu0
  %v476 = vadd.f32 0.0, %v475
  %v477 = vpop.f32.mrf.mxu0
  %v478 = vadd.f32 0.0, %v477
  %479 = vdwg.mxu0
  %v480 = vld [vmem:[%s12] sm:$0xff]
  %v481 = vld [vmem:[%s12 + $0x8] sm:$0xff]
  %v482 = vld [vmem:[%s12 + $0x10] sm:$0xff]
  %v483 = vld [vmem:[%s12 + $0x18] sm:$0xff]
  %v484 = vld [vmem:[%s12 + $0x20] sm:$0xff]
  %v485 = vld [vmem:[%s12 + $0x28] sm:$0xff]
  %v486 = vld [vmem:[%s12 + $0x30] sm:$0xff]
  %v487 = vld [vmem:[%s12 + $0x38] sm:$0xff]
  %v488 = vld [vmem:[%s12 + $0x40] sm:$0xff]
  %v489 = vld [vmem:[%s12 + $0x48] sm:$0xff]
  %v490 = vld [vmem:[%s12 + $0x50] sm:$0xff]
  %v491 = vld [vmem:[%s12 + $0x58] sm:$0xff]
  %v492 = vld [vmem:[%s12 + $0x60] sm:$0xff]
  %v493 = vld [vmem:[%s12 + $0x68] sm:$0xff]
  %v494 = vld [vmem:[%s12 + $0x70] sm:$0xff]
  %v495 = vld [vmem:[%s12 + $0x78] sm:$0xff]
  %v496 = vld [vmem:[%s12 + $0x80] sm:$0xff]
  %v497 = vld [vmem:[%s12 + $0x88] sm:$0xff]
  %v498 = vld [vmem:[%s12 + $0x90] sm:$0xff]
  %v499 = vld [vmem:[%s12 + $0x98] sm:$0xff]
  %v500 = vld [vmem:[%s12 + $0xa0] sm:$0xff]
  %v501 = vld [vmem:[%s12 + $0xa8] sm:$0xff]
  %v502 = vld [vmem:[%s12 + $0xb0] sm:$0xff]
  %v503 = vld [vmem:[%s12 + $0xb8] sm:$0xff]
  %v504 = vld [vmem:[%s12 + $0xc0] sm:$0xff]
  %v505 = vld [vmem:[%s12 + $0xc8] sm:$0xff]
  %v506 = vld [vmem:[%s12 + $0xd0] sm:$0xff]
  %v507 = vld [vmem:[%s12 + $0xd8] sm:$0xff]
  %v508 = vld [vmem:[%s12 + $0xe0] sm:$0xff]
  %v509 = vld [vmem:[%s12 + $0xe8] sm:$0xff]
  %v510 = vld [vmem:[%s12 + $0xf0] sm:$0xff]
  %v511 = vld [vmem:[%s12 + $0xf8] sm:$0xff]
  %v512 = vld [vmem:[%s12 + $0x100] sm:$0xff]
  %v513 = vld [vmem:[%s12 + $0x108] sm:$0xff]
  %v514 = vld [vmem:[%s12 + $0x110] sm:$0xff]
  %v515 = vld [vmem:[%s12 + $0x118] sm:$0xff]
  %v516 = vld [vmem:[%s12 + $0x120] sm:$0xff]
  %v517 = vld [vmem:[%s12 + $0x128] sm:$0xff]
  %v518 = vld [vmem:[%s12 + $0x130] sm:$0xff]
  %v519 = vld [vmem:[%s12 + $0x138] sm:$0xff]
  %v520 = vld [vmem:[%s12 + $0x140] sm:$0xff]
  %v521 = vld [vmem:[%s12 + $0x148] sm:$0xff]
  %v522 = vld [vmem:[%s12 + $0x150] sm:$0xff]
  %v523 = vld [vmem:[%s12 + $0x158] sm:$0xff]
  %v524 = vld [vmem:[%s12 + $0x160] sm:$0xff]
  %v525 = vld [vmem:[%s12 + $0x168] sm:$0xff]
  %v526 = vld [vmem:[%s12 + $0x170] sm:$0xff]
  %v527 = vld [vmem:[%s12 + $0x178] sm:$0xff]
  %v528 = vld [vmem:[%s12 + $0x180] sm:$0xff]
  %v529 = vld [vmem:[%s12 + $0x188] sm:$0xff]
  %v530 = vld [vmem:[%s12 + $0x190] sm:$0xff]
  %v531 = vld [vmem:[%s12 + $0x198] sm:$0xff]
  %v532 = vld [vmem:[%s12 + $0x1a0] sm:$0xff]
  %v533 = vld [vmem:[%s12 + $0x1a8] sm:$0xff]
  %v534 = vld [vmem:[%s12 + $0x1b0] sm:$0xff]
  %v535 = vld [vmem:[%s12 + $0x1b8] sm:$0xff]
  %v536 = vld [vmem:[%s12 + $0x1c0] sm:$0xff]
  %v537 = vld [vmem:[%s12 + $0x1c8] sm:$0xff]
  %v538 = vld [vmem:[%s12 + $0x1d0] sm:$0xff]
  %v539 = vld [vmem:[%s12 + $0x1d8] sm:$0xff]
  %v540 = vld [vmem:[%s12 + $0x1e0] sm:$0xff]
  %v541 = vld [vmem:[%s12 + $0x1e8] sm:$0xff]
  %v542 = vld [vmem:[%s12 + $0x1f0] sm:$0xff]
  %v543 = vld [vmem:[%s12 + $0x1f8] sm:$0xff]
  %544 = vmatprep.subr.mxu0 %v511
  %545 = vmatpush1.msra.mxu0 %v510
  %546 = vmatprep.subr.mxu0 %v509
  %547 = vmatpush1.msra.mxu0 %v508
  %548 = vmatprep.subr.mxu0 %v507
  %549 = vmatpush1.msra.mxu0 %v506
  %550 = vmatprep.subr.mxu0 %v505
  %551 = vmatpush1.msra.mxu0 %v504
  %552 = vmatprep.subr.mxu0 %v503
  %553 = vmatpush1.msra.mxu0 %v502
  %554 = vmatprep.subr.mxu0 %v501
  %555 = vmatpush1.msra.mxu0 %v500
  %556 = vmatprep.subr.mxu0 %v499
  %557 = vmatpush1.msra.mxu0 %v498
  %558 = vmatprep.subr.mxu0 %v497
  %559 = vmatpush1.msra.mxu0 %v496
  %560 = vmatprep.subr.mxu0 %v495
  %561 = vmatpush1.msra.mxu0 %v494
  %562 = vmatprep.subr.mxu0 %v493
  %563 = vmatpush1.msra.mxu0 %v492
  %564 = vmatprep.subr.mxu0 %v491
  %565 = vmatpush1.msra.mxu0 %v490
  %566 = vmatprep.subr.mxu0 %v489
  %567 = vmatpush1.msra.mxu0 %v488
  %568 = vmatprep.subr.mxu0 %v487
  %569 = vmatpush1.msra.mxu0 %v486
  %570 = vmatprep.subr.mxu0 %v485
  %571 = vmatpush1.msra.mxu0 %v484
  %572 = vmatprep.subr.mxu0 %v483
  %573 = vmatpush1.msra.mxu0 %v482
  %574 = vmatprep.subr.mxu0 %v481
  %575 = vmatpush1.msra.mxu0 %v480
  %576 = vmatprep.subr.mxu0 %v543
  %577 = vmatpush2.msra.mxu0 %v542
  %578 = vmatprep.subr.mxu0 %v541
  %579 = vmatpush2.msra.mxu0 %v540
  %580 = vmatprep.subr.mxu0 %v539
  %581 = vmatpush2.msra.mxu0 %v538
  %582 = vmatprep.subr.mxu0 %v537
  %583 = vmatpush2.msra.mxu0 %v536
  %584 = vmatprep.subr.mxu0 %v535
  %585 = vmatpush2.msra.mxu0 %v534
  %586 = vmatprep.subr.mxu0 %v533
  %587 = vmatpush2.msra.mxu0 %v532
  %588 = vmatprep.subr.mxu0 %v531
  %589 = vmatpush2.msra.mxu0 %v530
  %590 = vmatprep.subr.mxu0 %v529
  %591 = vmatpush2.msra.mxu0 %v528
  %592 = vmatprep.subr.mxu0 %v527
  %593 = vmatpush2.msra.mxu0 %v526
  %594 = vmatprep.subr.mxu0 %v525
  %595 = vmatpush2.msra.mxu0 %v524
  %596 = vmatprep.subr.mxu0 %v523
  %597 = vmatpush2.msra.mxu0 %v522
  %598 = vmatprep.subr.mxu0 %v521
  %599 = vmatpush2.msra.mxu0 %v520
  %600 = vmatprep.subr.mxu0 %v519
  %601 = vmatpush2.msra.mxu0 %v518
  %602 = vmatprep.subr.mxu0 %v517
  %603 = vmatpush2.msra.mxu0 %v516
  %604 = vmatprep.subr.mxu0 %v515
  %605 = vmatpush2.msra.mxu0 %v514
  %606 = vmatprep.subr.mxu0 %v513
  %607 = vmatpush2.msra.mxu0 %v512
  %608 = vmatprep.mubr.f32.mxu0 %v344
  %609 = vmatmul.mubr.f32.gmra.mxu0 %v343
  %v610 = vpop.f32.mrf.mxu0
  %v611 = vadd.f32 0.0, %v610
  %v612 = vpop.f32.mrf.mxu0
  %v613 = vadd.f32 0.0, %v612
  %614 = vdwg.mxu0
  %v615 = vld [vmem:[%s2] sm:$0xff]
  %v616 = vld [vmem:[%s3] sm:$0xff]
  %v618 = vsel %vm157, %v616, 0
  %v621 = vsel %vm151, %v611, 0
  %v624 = vsel %vm151, %v613, 0
  %626 = vmatprep.subr.mxu0 0.0
  %627 = vmatpush1.msra.mxu0 0.0
  %628 = vmatprep.subr.mxu0 0.0
  %629 = vmatpush1.msra.mxu0 0.0
  %630 = vmatprep.subr.mxu0 0.0
  %631 = vmatpush1.msra.mxu0 0.0
  %632 = vmatprep.subr.mxu0 0.0
  %633 = vmatpush1.msra.mxu0 0.0
  %634 = vmatprep.subr.mxu0 0.0
  %635 = vmatpush1.msra.mxu0 0.0
  %636 = vmatprep.subr.mxu0 0.0
  %637 = vmatpush1.msra.mxu0 0.0
  %638 = vmatprep.subr.mxu0 0.0
  %639 = vmatpush1.msra.mxu0 0.0
  %640 = vmatprep.subr.mxu0 0.0
  %641 = vmatpush1.msra.mxu0 0.0
  %642 = vmatprep.subr.mxu0 0.0
  %643 = vmatpush1.msra.mxu0 0.0
  %644 = vmatprep.subr.mxu0 0.0
  %645 = vmatpush1.msra.mxu0 0.0
  %646 = vmatprep.subr.mxu0 0.0
  %647 = vmatpush1.msra.mxu0 0.0
  %648 = vmatprep.subr.mxu0 0.0
  %649 = vmatpush1.msra.mxu0 0.0
  %650 = vmatprep.subr.mxu0 0.0
  %651 = vmatpush1.msra.mxu0 0.0
  %652 = vmatprep.subr.mxu0 0.0
  %653 = vmatpush1.msra.mxu0 0.0
  %654 = vmatprep.subr.mxu0 0.0
  %655 = vmatpush1.msra.mxu0 0.0
  %656 = vmatprep.subr.mxu0 %v624
  %657 = vmatpush1.msra.mxu0 %v621
  %658 = vmatprep.subr.mxu0 0.0
  %659 = vmatpush2.msra.mxu0 0.0
  %660 = vmatprep.subr.mxu0 0.0
  %661 = vmatpush2.msra.mxu0 0.0
  %662 = vmatprep.subr.mxu0 0.0
  %663 = vmatpush2.msra.mxu0 0.0
  %664 = vmatprep.subr.mxu0 0.0
  %665 = vmatpush2.msra.mxu0 0.0
  %666 = vmatprep.subr.mxu0 0.0
  %667 = vmatpush2.msra.mxu0 0.0
  %668 = vmatprep.subr.mxu0 0.0
  %669 = vmatpush2.msra.mxu0 0.0
  %670 = vmatprep.subr.mxu0 0.0
  %671 = vmatpush2.msra.mxu0 0.0
  %672 = vmatprep.subr.mxu0 0.0
  %673 = vmatpush2.msra.mxu0 0.0
  %674 = vmatprep.subr.mxu0 0.0
  %675 = vmatpush2.msra.mxu0 0.0
  %676 = vmatprep.subr.mxu0 0.0
  %677 = vmatpush2.msra.mxu0 0.0
  %678 = vmatprep.subr.mxu0 0.0
  %679 = vmatpush2.msra.mxu0 0.0
  %680 = vmatprep.subr.mxu0 0.0
  %681 = vmatpush2.msra.mxu0 0.0
  %682 = vmatprep.subr.mxu0 0.0
  %683 = vmatpush2.msra.mxu0 0.0
  %684 = vmatprep.subr.mxu0 0.0
  %685 = vmatpush2.msra.mxu0 0.0
  %686 = vmatprep.subr.mxu0 0.0
  %687 = vmatpush2.msra.mxu0 0.0
  %688 = vmatprep.subr.mxu0 0.0
  %689 = vmatpush2.msra.mxu0 0.0
  %690 = vmatprep.mubr.f32.mxu0 0.0
  %691 = vmatmul.mubr.f32.gmra.mxu0 %v618
  %v692 = vpop.f32.mrf.mxu0
  %v693 = vadd.f32 0.0, %v692
  %v694 = vpop.f32.mrf.mxu0
  %v695 = vadd.f32 0.0, %v694
  %696 = vdwg.mxu0
  %v698 = vsel %vm157, %v615, 0
  %v701 = vsel %vm151, %v476, 0
  %v704 = vsel %vm151, %v478, 0
  %706 = vmatprep.subr.mxu0 0.0
  %707 = vmatpush1.msra.mxu0 0.0
  %708 = vmatprep.subr.mxu0 0.0
  %709 = vmatpush1.msra.mxu0 0.0
  %710 = vmatprep.subr.mxu0 0.0
  %711 = vmatpush1.msra.mxu0 0.0
  %712 = vmatprep.subr.mxu0 0.0
  %713 = vmatpush1.msra.mxu0 0.0
  %714 = vmatprep.subr.mxu0 0.0
  %715 = vmatpush1.msra.mxu0 0.0
  %716 = vmatprep.subr.mxu0 0.0
  %717 = vmatpush1.msra.mxu0 0.0
  %718 = vmatprep.subr.mxu0 0.0
  %719 = vmatpush1.msra.mxu0 0.0
  %720 = vmatprep.subr.mxu0 0.0
  %721 = vmatpush1.msra.mxu0 0.0
  %722 = vmatprep.subr.mxu0 0.0
  %723 = vmatpush1.msra.mxu0 0.0
  %724 = vmatprep.subr.mxu0 0.0
  %725 = vmatpush1.msra.mxu0 0.0
  %726 = vmatprep.subr.mxu0 0.0
  %727 = vmatpush1.msra.mxu0 0.0
  %728 = vmatprep.subr.mxu0 0.0
  %729 = vmatpush1.msra.mxu0 0.0
  %730 = vmatprep.subr.mxu0 0.0
  %731 = vmatpush1.msra.mxu0 0.0
  %732 = vmatprep.subr.mxu0 0.0
  %733 = vmatpush1.msra.mxu0 0.0
  %734 = vmatprep.subr.mxu0 0.0
  %735 = vmatpush1.msra.mxu0 0.0
  %736 = vmatprep.subr.mxu0 %v704
  %737 = vmatpush1.msra.mxu0 %v701
  %738 = vmatprep.subr.mxu0 0.0
  %739 = vmatpush2.msra.mxu0 0.0
  %740 = vmatprep.subr.mxu0 0.0
  %741 = vmatpush2.msra.mxu0 0.0
  %742 = vmatprep.subr.mxu0 0.0
  %743 = vmatpush2.msra.mxu0 0.0
  %744 = vmatprep.subr.mxu0 0.0
  %745 = vmatpush2.msra.mxu0 0.0
  %746 = vmatprep.subr.mxu0 0.0
  %747 = vmatpush2.msra.mxu0 0.0
  %748 = vmatprep.subr.mxu0 0.0
  %749 = vmatpush2.msra.mxu0 0.0
  %750 = vmatprep.subr.mxu0 0.0
  %751 = vmatpush2.msra.mxu0 0.0
  %752 = vmatprep.subr.mxu0 0.0
  %753 = vmatpush2.msra.mxu0 0.0
  %754 = vmatprep.subr.mxu0 0.0
  %755 = vmatpush2.msra.mxu0 0.0
  %756 = vmatprep.subr.mxu0 0.0
  %757 = vmatpush2.msra.mxu0 0.0
  %758 = vmatprep.subr.mxu0 0.0
  %759 = vmatpush2.msra.mxu0 0.0
  %760 = vmatprep.subr.mxu0 0.0
  %761 = vmatpush2.msra.mxu0 0.0
  %762 = vmatprep.subr.mxu0 0.0
  %763 = vmatpush2.msra.mxu0 0.0
  %764 = vmatprep.subr.mxu0 0.0
  %765 = vmatpush2.msra.mxu0 0.0
  %766 = vmatprep.subr.mxu0 0.0
  %767 = vmatpush2.msra.mxu0 0.0
  %768 = vmatprep.subr.mxu0 0.0
  %769 = vmatpush2.msra.mxu0 0.0
  %770 = vmatprep.mubr.f32.mxu0 0.0
  %771 = vmatmul.mubr.f32.gmra.mxu0 %v698
  %v772 = vpop.f32.mrf.mxu0
  %v773 = vadd.f32 %v693, %v772
  %v774 = vpop.f32.mrf.mxu0
  %v775 = vadd.f32 %v695, %v774
  %776 = vdwg.mxu0
  %v777 = vld [vmem:[%s8] sm:$0xff]
  %v778 = vld [vmem:[%s9] sm:$0xff]
  %v779 = vld [vmem:[%s10] sm:$0xff]
  %vm780 = vcmask 130048
  %v781 = vsel %vm780, %v775, 0.0
  %v782 = vadd.f32 %v773, %v781
  %783 = vadd.xlane.f32.xlu0 %v782
  %v784 = vpop.xlane.xlu0 %783
  %v786 = vsel %vm55, %v777, 0
  %788 = vmatprep.subr.mxu0 0.0
  %789 = vmatpush1.msra.mxu0 0.0
  %790 = vmatprep.subr.mxu0 0.0
  %791 = vmatpush1.msra.mxu0 0.0
  %792 = vmatprep.subr.mxu0 0.0
  %793 = vmatpush1.msra.mxu0 0.0
  %794 = vmatprep.subr.mxu0 0.0
  %795 = vmatpush1.msra.mxu0 0.0
  %796 = vmatprep.subr.mxu0 0.0
  %797 = vmatpush1.msra.mxu0 0.0
  %798 = vmatprep.subr.mxu0 0.0
  %799 = vmatpush1.msra.mxu0 0.0
  %800 = vmatprep.subr.mxu0 0.0
  %801 = vmatpush1.msra.mxu0 0.0
  %802 = vmatprep.subr.mxu0 0.0
  %803 = vmatpush1.msra.mxu0 0.0
  %804 = vmatprep.subr.mxu0 0.0
  %805 = vmatpush1.msra.mxu0 0.0
  %806 = vmatprep.subr.mxu0 0.0
  %807 = vmatpush1.msra.mxu0 0.0
  %808 = vmatprep.subr.mxu0 0.0
  %809 = vmatpush1.msra.mxu0 0.0
  %810 = vmatprep.subr.mxu0 0.0
  %811 = vmatpush1.msra.mxu0 0.0
  %812 = vmatprep.subr.mxu0 0.0
  %813 = vmatpush1.msra.mxu0 0.0
  %814 = vmatprep.subr.mxu0 0.0
  %815 = vmatpush1.msra.mxu0 0.0
  %816 = vmatprep.subr.mxu0 0.0
  %817 = vmatpush1.msra.mxu0 0.0
  %818 = vmatprep.subr.mxu0 0.0
  %819 = vmatpush1.msra.mxu0 %v784
  %820 = vmatprep.subr.mxu0 0.0
  %821 = vmatpush2.msra.mxu0 0.0
  %822 = vmatprep.subr.mxu0 0.0
  %823 = vmatpush2.msra.mxu0 0.0
  %824 = vmatprep.subr.mxu0 0.0
  %825 = vmatpush2.msra.mxu0 0.0
  %826 = vmatprep.subr.mxu0 0.0
  %827 = vmatpush2.msra.mxu0 0.0
  %828 = vmatprep.subr.mxu0 0.0
  %829 = vmatpush2.msra.mxu0 0.0
  %830 = vmatprep.subr.mxu0 0.0
  %831 = vmatpush2.msra.mxu0 0.0
  %832 = vmatprep.subr.mxu0 0.0
  %833 = vmatpush2.msra.mxu0 0.0
  %834 = vmatprep.subr.mxu0 0.0
  %835 = vmatpush2.msra.mxu0 0.0
  %836 = vmatprep.subr.mxu0 0.0
  %837 = vmatpush2.msra.mxu0 0.0
  %838 = vmatprep.subr.mxu0 0.0
  %839 = vmatpush2.msra.mxu0 0.0
  %840 = vmatprep.subr.mxu0 0.0
  %841 = vmatpush2.msra.mxu0 0.0
  %842 = vmatprep.subr.mxu0 0.0
  %843 = vmatpush2.msra.mxu0 0.0
  %844 = vmatprep.subr.mxu0 0.0
  %845 = vmatpush2.msra.mxu0 0.0
  %846 = vmatprep.subr.mxu0 0.0
  %847 = vmatpush2.msra.mxu0 0.0
  %848 = vmatprep.subr.mxu0 0.0
  %849 = vmatpush2.msra.mxu0 0.0
  %850 = vmatprep.subr.mxu0 0.0
  %851 = vmatpush2.msra.mxu0 0.0
  %852 = vmatprep.mubr.f32.mxu0 0.0
  %853 = vmatmul.mubr.f32.gmra.mxu0 %v786
  %v854 = vpop.f32.mrf.mxu0
  %v855 = vadd.f32 0.0, %v854
  %v856 = vpop.f32.mrf.mxu0
  %857 = vdwg.mxu0
  %859 = vset.pattern.permute.xlu0 0
  %860 = vperm.xlu0 %859, %v855
  %v861 = vpop.permute.xlu0 %860
  %v863 = vsub.f32 %v773, %v861
  %v864 = vsub.f32 %v775, %v861
  %v865 = vmul.f32 %v863, %v863
  %v866 = vmul.f32 %v864, %v864
  %v867 = vsel %vm780, %v866, 0.0
  %v868 = vadd.f32 %v865, %v867
  %869 = vadd.xlane.f32.xlu0 %v868
  %v870 = vpop.xlane.xlu0 %869
  %871 = vmatprep.subr.mxu0 0.0
  %872 = vmatpush1.msra.mxu0 0.0
  %873 = vmatprep.subr.mxu0 0.0
  %874 = vmatpush1.msra.mxu0 0.0
  %875 = vmatprep.subr.mxu0 0.0
  %876 = vmatpush1.msra.mxu0 0.0
  %877 = vmatprep.subr.mxu0 0.0
  %878 = vmatpush1.msra.mxu0 0.0
  %879 = vmatprep.subr.mxu0 0.0
  %880 = vmatpush1.msra.mxu0 0.0
  %881 = vmatprep.subr.mxu0 0.0
  %882 = vmatpush1.msra.mxu0 0.0
  %883 = vmatprep.subr.mxu0 0.0
  %884 = vmatpush1.msra.mxu0 0.0
  %885 = vmatprep.subr.mxu0 0.0
  %886 = vmatpush1.msra.mxu0 0.0
  %887 = vmatprep.subr.mxu0 0.0
  %888 = vmatpush1.msra.mxu0 0.0
  %889 = vmatprep.subr.mxu0 0.0
  %890 = vmatpush1.msra.mxu0 0.0
  %891 = vmatprep.subr.mxu0 0.0
  %892 = vmatpush1.msra.mxu0 0.0
  %893 = vmatprep.subr.mxu0 0.0
  %894 = vmatpush1.msra.mxu0 0.0
  %895 = vmatprep.subr.mxu0 0.0
  %896 = vmatpush1.msra.mxu0 0.0
  %897 = vmatprep.subr.mxu0 0.0
  %898 = vmatpush1.msra.mxu0 0.0
  %899 = vmatprep.subr.mxu0 0.0
  %900 = vmatpush1.msra.mxu0 0.0
  %901 = vmatprep.subr.mxu0 0.0
  %902 = vmatpush1.msra.mxu0 %v870
  %903 = vmatprep.subr.mxu0 0.0
  %904 = vmatpush2.msra.mxu0 0.0
  %905 = vmatprep.subr.mxu0 0.0
  %906 = vmatpush2.msra.mxu0 0.0
  %907 = vmatprep.subr.mxu0 0.0
  %908 = vmatpush2.msra.mxu0 0.0
  %909 = vmatprep.subr.mxu0 0.0
  %910 = vmatpush2.msra.mxu0 0.0
  %911 = vmatprep.subr.mxu0 0.0
  %912 = vmatpush2.msra.mxu0 0.0
  %913 = vmatprep.subr.mxu0 0.0
  %914 = vmatpush2.msra.mxu0 0.0
  %915 = vmatprep.subr.mxu0 0.0
  %916 = vmatpush2.msra.mxu0 0.0
  %917 = vmatprep.subr.mxu0 0.0
  %918 = vmatpush2.msra.mxu0 0.0
  %919 = vmatprep.subr.mxu0 0.0
  %920 = vmatpush2.msra.mxu0 0.0
  %921 = vmatprep.subr.mxu0 0.0
  %922 = vmatpush2.msra.mxu0 0.0
  %923 = vmatprep.subr.mxu0 0.0
  %924 = vmatpush2.msra.mxu0 0.0
  %925 = vmatprep.subr.mxu0 0.0
  %926 = vmatpush2.msra.mxu0 0.0
  %927 = vmatprep.subr.mxu0 0.0
  %928 = vmatpush2.msra.mxu0 0.0
  %929 = vmatprep.subr.mxu0 0.0
  %930 = vmatpush2.msra.mxu0 0.0
  %931 = vmatprep.subr.mxu0 0.0
  %932 = vmatpush2.msra.mxu0 0.0
  %933 = vmatprep.subr.mxu0 0.0
  %934 = vmatpush2.msra.mxu0 0.0
  %935 = vmatprep.mubr.f32.mxu0 0.0
  %936 = vmatmul.mubr.f32.gmra.mxu0 %v786
  %v937 = vpop.f32.mrf.mxu0
  %v938 = vadd.f32 1e-05, %v937
  %v939 = vpop.f32.mrf.mxu0
  %940 = vdwg.mxu0
  %v941 = vrsqrt.pop %v938
  %943 = vset.pattern.permute.xlu0 0
  %944 = vperm.xlu0 %943, %v941
  %v945 = vpop.permute.xlu0 %944
  %v947 = vmul.f32 %v863, %v945
  %v948 = vmul.f32 %v864, %v945
  %950 = vset.pattern.permute.xlu0 0
  %951 = vperm.xlu0 %950, %v778
  %v952 = vpop.permute.xlu0 %951
  %v954 = vmul.f32 %v947, %v952
  %v955 = vmul.f32 %v948, %v952
  %957 = vset.pattern.permute.xlu0 0
  %958 = vperm.xlu0 %957, %v779
  %v959 = vpop.permute.xlu0 %958
  %v961 = vadd.f32 %v954, %v959
  %v962 = vadd.f32 %v955, %v959
  %v963 = vmax.f32 %v961, 0.0
  %v964 = vmax.f32 %v962, 0.0
  %v965 = vld [vmem:[%s13] sm:$0xff]
  %v966 = vld [vmem:[%s13 + $0x8] sm:$0xff]
  %v967 = vld [vmem:[%s13 + $0x10] sm:$0xff]
  %v968 = vld [vmem:[%s13 + $0x18] sm:$0xff]
  %v969 = vld [vmem:[%s13 + $0x20] sm:$0xff]
  %v970 = vld [vmem:[%s13 + $0x28] sm:$0xff]
  %v971 = vld [vmem:[%s13 + $0x30] sm:$0xff]
  %v972 = vld [vmem:[%s13 + $0x38] sm:$0xff]
  %v973 = vld [vmem:[%s13 + $0x40] sm:$0xff]
  %v974 = vld [vmem:[%s13 + $0x48] sm:$0xff]
  %v975 = vld [vmem:[%s13 + $0x50] sm:$0xff]
  %v976 = vld [vmem:[%s13 + $0x58] sm:$0xff]
  %v977 = vld [vmem:[%s13 + $0x60] sm:$0xff]
  %v978 = vld [vmem:[%s13 + $0x68] sm:$0xff]
  %v979 = vld [vmem:[%s13 + $0x70] sm:$0xff]
  %v980 = vld [vmem:[%s13 + $0x78] sm:$0xff]
  %v981 = vld [vmem:[%s13 + $0x80] sm:$0xff]
  %v982 = vld [vmem:[%s13 + $0x88] sm:$0xff]
  %v983 = vld [vmem:[%s13 + $0x90] sm:$0xff]
  %v984 = vld [vmem:[%s13 + $0x98] sm:$0xff]
  %v985 = vld [vmem:[%s13 + $0xa0] sm:$0xff]
  %v986 = vld [vmem:[%s13 + $0xa8] sm:$0xff]
  %v987 = vld [vmem:[%s13 + $0xb0] sm:$0xff]
  %v988 = vld [vmem:[%s13 + $0xb8] sm:$0xff]
  %v989 = vld [vmem:[%s13 + $0xc0] sm:$0xff]
  %v990 = vld [vmem:[%s13 + $0xc8] sm:$0xff]
  %v991 = vld [vmem:[%s13 + $0xd0] sm:$0xff]
  %v992 = vld [vmem:[%s13 + $0xd8] sm:$0xff]
  %v993 = vld [vmem:[%s13 + $0xe0] sm:$0xff]
  %v994 = vld [vmem:[%s13 + $0xe8] sm:$0xff]
  %v995 = vld [vmem:[%s13 + $0xf0] sm:$0xff]
  %v996 = vld [vmem:[%s13 + $0xf8] sm:$0xff]
  %v997 = vld [vmem:[%s13 + $0x100] sm:$0xff]
  %v998 = vld [vmem:[%s13 + $0x108] sm:$0xff]
  %v999 = vld [vmem:[%s13 + $0x110] sm:$0xff]
  %v1000 = vld [vmem:[%s13 + $0x118] sm:$0xff]
  %v1001 = vld [vmem:[%s14] sm:$0xff]
  %v1002 = vld [vmem:[%s14 + $0x8] sm:$0xff]
  %v1003 = vld [vmem:[%s14 + $0x10] sm:$0xff]
  %v1004 = vld [vmem:[%s14 + $0x18] sm:$0xff]
  %v1005 = vld [vmem:[%s14 + $0x20] sm:$0xff]
  %v1006 = vld [vmem:[%s14 + $0x28] sm:$0xff]
  %v1007 = vld [vmem:[%s14 + $0x30] sm:$0xff]
  %v1008 = vld [vmem:[%s14 + $0x38] sm:$0xff]
  %v1009 = vld [vmem:[%s14 + $0x40] sm:$0xff]
  %v1010 = vld [vmem:[%s14 + $0x48] sm:$0xff]
  %v1011 = vld [vmem:[%s14 + $0x50] sm:$0xff]
  %v1012 = vld [vmem:[%s14 + $0x58] sm:$0xff]
  %v1013 = vld [vmem:[%s14 + $0x60] sm:$0xff]
  %v1014 = vld [vmem:[%s14 + $0x68] sm:$0xff]
  %v1015 = vld [vmem:[%s14 + $0x70] sm:$0xff]
  %v1016 = vld [vmem:[%s14 + $0x78] sm:$0xff]
  %v1017 = vld [vmem:[%s14 + $0x80] sm:$0xff]
  %v1018 = vld [vmem:[%s14 + $0x88] sm:$0xff]
  %v1019 = vld [vmem:[%s14 + $0x90] sm:$0xff]
  %v1020 = vld [vmem:[%s14 + $0x98] sm:$0xff]
  %v1021 = vld [vmem:[%s14 + $0xa0] sm:$0xff]
  %v1022 = vld [vmem:[%s14 + $0xa8] sm:$0xff]
  %v1023 = vld [vmem:[%s14 + $0xb0] sm:$0xff]
  %v1024 = vld [vmem:[%s14 + $0xb8] sm:$0xff]
  %v1025 = vld [vmem:[%s14 + $0xc0] sm:$0xff]
  %v1026 = vld [vmem:[%s14 + $0xc8] sm:$0xff]
  %v1027 = vld [vmem:[%s14 + $0xd0] sm:$0xff]
  %v1028 = vld [vmem:[%s14 + $0xd8] sm:$0xff]
  %v1029 = vld [vmem:[%s14 + $0xe0] sm:$0xff]
  %v1030 = vld [vmem:[%s14 + $0xe8] sm:$0xff]
  %v1031 = vld [vmem:[%s14 + $0xf0] sm:$0xff]
  %v1032 = vld [vmem:[%s14 + $0xf8] sm:$0xff]
  %v1033 = vld [vmem:[%s14 + $0x100] sm:$0xff]
  %v1034 = vld [vmem:[%s14 + $0x108] sm:$0xff]
  %v1035 = vld [vmem:[%s14 + $0x110] sm:$0xff]
  %v1036 = vld [vmem:[%s14 + $0x118] sm:$0xff]
  %v1039 = vrot.slane %v963, 4
  %v1040 = vrot.slane %v964, 4
  %v1042 = vsel %vm780, %v1040, 0
  %1044 = vmatprep.subr.mxu0 %v1032
  %1045 = vmatpush1.msra.mxu0 %v1031
  %1046 = vmatprep.subr.mxu0 %v1030
  %1047 = vmatpush1.msra.mxu0 %v1029
  %1048 = vmatprep.subr.mxu0 %v1028
  %1049 = vmatpush1.msra.mxu0 %v1027
  %1050 = vmatprep.subr.mxu0 %v1026
  %1051 = vmatpush1.msra.mxu0 %v1025
  %1052 = vmatprep.subr.mxu0 %v1024
  %1053 = vmatpush1.msra.mxu0 %v1023
  %1054 = vmatprep.subr.mxu0 %v1022
  %1055 = vmatpush1.msra.mxu0 %v1021
  %1056 = vmatprep.subr.mxu0 %v1020
  %1057 = vmatpush1.msra.mxu0 %v1019
  %1058 = vmatprep.subr.mxu0 %v1018
  %1059 = vmatpush1.msra.mxu0 %v1017
  %1060 = vmatprep.subr.mxu0 %v1016
  %1061 = vmatpush1.msra.mxu0 %v1015
  %1062 = vmatprep.subr.mxu0 %v1014
  %1063 = vmatpush1.msra.mxu0 %v1013
  %1064 = vmatprep.subr.mxu0 %v1012
  %1065 = vmatpush1.msra.mxu0 %v1011
  %1066 = vmatprep.subr.mxu0 %v1010
  %1067 = vmatpush1.msra.mxu0 %v1009
  %1068 = vmatprep.subr.mxu0 %v1008
  %1069 = vmatpush1.msra.mxu0 %v1007
  %1070 = vmatprep.subr.mxu0 %v1006
  %1071 = vmatpush1.msra.mxu0 %v1005
  %1072 = vmatprep.subr.mxu0 %v1004
  %1073 = vmatpush1.msra.mxu0 %v1003
  %1074 = vmatprep.subr.mxu0 %v1002
  %1075 = vmatpush1.msra.mxu0 %v1001
  %1076 = vmatprep.subr.mxu0 0.0
  %1077 = vmatpush2.msra.mxu0 0.0
  %1078 = vmatprep.subr.mxu0 0.0
  %1079 = vmatpush2.msra.mxu0 0.0
  %1080 = vmatprep.subr.mxu0 0.0
  %1081 = vmatpush2.msra.mxu0 0.0
  %1082 = vmatprep.subr.mxu0 0.0
  %1083 = vmatpush2.msra.mxu0 0.0
  %1084 = vmatprep.subr.mxu0 0.0
  %1085 = vmatpush2.msra.mxu0 0.0
  %1086 = vmatprep.subr.mxu0 0.0
  %1087 = vmatpush2.msra.mxu0 0.0
  %1088 = vmatprep.subr.mxu0 0.0
  %1089 = vmatpush2.msra.mxu0 0.0
  %1090 = vmatprep.subr.mxu0 0.0
  %1091 = vmatpush2.msra.mxu0 0.0
  %1092 = vmatprep.subr.mxu0 0.0
  %1093 = vmatpush2.msra.mxu0 0.0
  %1094 = vmatprep.subr.mxu0 0.0
  %1095 = vmatpush2.msra.mxu0 0.0
  %1096 = vmatprep.subr.mxu0 0.0
  %1097 = vmatpush2.msra.mxu0 0.0
  %1098 = vmatprep.subr.mxu0 0.0
  %1099 = vmatpush2.msra.mxu0 0.0
  %1100 = vmatprep.subr.mxu0 0.0
  %1101 = vmatpush2.msra.mxu0 0.0
  %1102 = vmatprep.subr.mxu0 0.0
  %1103 = vmatpush2.msra.mxu0 0.0
  %1104 = vmatprep.subr.mxu0 %v1036
  %1105 = vmatpush2.msra.mxu0 %v1035
  %1106 = vmatprep.subr.mxu0 %v1034
  %1107 = vmatpush2.msra.mxu0 %v1033
  %1108 = vmatprep.mubr.f32.mxu0 %v1042
  %1109 = vmatmul.mubr.f32.gmra.mxu0 %v1039
  %v1110 = vpop.f32.mrf.mxu0
  %v1111 = vadd.f32 0.0, %v1110
  %v1112 = vpop.f32.mrf.mxu0
  %v1113 = vadd.f32 0.0, %v1112
  %1114 = vdwg.mxu0
  %v1115 = vsel %vm780, %v964, 0
  %1117 = vmatprep.subr.mxu0 %v996
  %1118 = vmatpush1.msra.mxu0 %v995
  %1119 = vmatprep.subr.mxu0 %v994
  %1120 = vmatpush1.msra.mxu0 %v993
  %1121 = vmatprep.subr.mxu0 %v992
  %1122 = vmatpush1.msra.mxu0 %v991
  %1123 = vmatprep.subr.mxu0 %v990
  %1124 = vmatpush1.msra.mxu0 %v989
  %1125 = vmatprep.subr.mxu0 %v988
  %1126 = vmatpush1.msra.mxu0 %v987
  %1127 = vmatprep.subr.mxu0 %v986
  %1128 = vmatpush1.msra.mxu0 %v985
  %1129 = vmatprep.subr.mxu0 %v984
  %1130 = vmatpush1.msra.mxu0 %v983
  %1131 = vmatprep.subr.mxu0 %v982
  %1132 = vmatpush1.msra.mxu0 %v981
  %1133 = vmatprep.subr.mxu0 %v980
  %1134 = vmatpush1.msra.mxu0 %v979
  %1135 = vmatprep.subr.mxu0 %v978
  %1136 = vmatpush1.msra.mxu0 %v977
  %1137 = vmatprep.subr.mxu0 %v976
  %1138 = vmatpush1.msra.mxu0 %v975
  %1139 = vmatprep.subr.mxu0 %v974
  %1140 = vmatpush1.msra.mxu0 %v973
  %1141 = vmatprep.subr.mxu0 %v972
  %1142 = vmatpush1.msra.mxu0 %v971
  %1143 = vmatprep.subr.mxu0 %v970
  %1144 = vmatpush1.msra.mxu0 %v969
  %1145 = vmatprep.subr.mxu0 %v968
  %1146 = vmatpush1.msra.mxu0 %v967
  %1147 = vmatprep.subr.mxu0 %v966
  %1148 = vmatpush1.msra.mxu0 %v965
  %1149 = vmatprep.subr.mxu0 0.0
  %1150 = vmatpush2.msra.mxu0 0.0
  %1151 = vmatprep.subr.mxu0 0.0
  %1152 = vmatpush2.msra.mxu0 0.0
  %1153 = vmatprep.subr.mxu0 0.0
  %1154 = vmatpush2.msra.mxu0 0.0
  %1155 = vmatprep.subr.mxu0 0.0
  %1156 = vmatpush2.msra.mxu0 0.0
  %1157 = vmatprep.subr.mxu0 0.0
  %1158 = vmatpush2.msra.mxu0 0.0
  %1159 = vmatprep.subr.mxu0 0.0
  %1160 = vmatpush2.msra.mxu0 0.0
  %1161 = vmatprep.subr.mxu0 0.0
  %1162 = vmatpush2.msra.mxu0 0.0
  %1163 = vmatprep.subr.mxu0 0.0
  %1164 = vmatpush2.msra.mxu0 0.0
  %1165 = vmatprep.subr.mxu0 0.0
  %1166 = vmatpush2.msra.mxu0 0.0
  %1167 = vmatprep.subr.mxu0 0.0
  %1168 = vmatpush2.msra.mxu0 0.0
  %1169 = vmatprep.subr.mxu0 0.0
  %1170 = vmatpush2.msra.mxu0 0.0
  %1171 = vmatprep.subr.mxu0 0.0
  %1172 = vmatpush2.msra.mxu0 0.0
  %1173 = vmatprep.subr.mxu0 0.0
  %1174 = vmatpush2.msra.mxu0 0.0
  %1175 = vmatprep.subr.mxu0 0.0
  %1176 = vmatpush2.msra.mxu0 0.0
  %1177 = vmatprep.subr.mxu0 %v1000
  %1178 = vmatpush2.msra.mxu0 %v999
  %1179 = vmatprep.subr.mxu0 %v998
  %1180 = vmatpush2.msra.mxu0 %v997
  %1181 = vmatprep.mubr.f32.mxu0 %v1115
  %1182 = vmatmul.mubr.f32.gmra.mxu0 %v963
  %v1183 = vpop.f32.mrf.mxu0
  %v1184 = vadd.f32 %v1111, %v1183
  %v1185 = vpop.f32.mrf.mxu0
  %v1186 = vadd.f32 %v1113, %v1185
  %1187 = vdwg.mxu0
  %v1188 = vld [vmem:[%s4] sm:$0xff]
  %v1189 = vadd.f32 %v343, %v1184
  %v1190 = vadd.f32 %v344, %v1186
  %v1195 = vrot.slane %v138, 4
  %v1196 = vrot.slane %v144, 4
  %v1197 = vsel %vm151, %v1195, %v1196
  %v1198 = vrot.slane %v140, 4
  %v1199 = vrot.slane %v146, 4
  %v1200 = vsel %vm151, %v1198, %v1199
  %v1204 = vsel %vm157, %v1188, 0
  %v1207 = vsel %vm151, %v1189, 0
  %v1210 = vsel %vm151, %v1190, 0
  %1212 = vmatprep.subr.mxu0 0.0
  %1213 = vmatpush1.msra.mxu0 0.0
  %1214 = vmatprep.subr.mxu0 0.0
  %1215 = vmatpush1.msra.mxu0 0.0
  %1216 = vmatprep.subr.mxu0 0.0
  %1217 = vmatpush1.msra.mxu0 0.0
  %1218 = vmatprep.subr.mxu0 0.0
  %1219 = vmatpush1.msra.mxu0 0.0
  %1220 = vmatprep.subr.mxu0 0.0
  %1221 = vmatpush1.msra.mxu0 0.0
  %1222 = vmatprep.subr.mxu0 0.0
  %1223 = vmatpush1.msra.mxu0 0.0
  %1224 = vmatprep.subr.mxu0 0.0
  %1225 = vmatpush1.msra.mxu0 0.0
  %1226 = vmatprep.subr.mxu0 0.0
  %1227 = vmatpush1.msra.mxu0 0.0
  %1228 = vmatprep.subr.mxu0 0.0
  %1229 = vmatpush1.msra.mxu0 0.0
  %1230 = vmatprep.subr.mxu0 0.0
  %1231 = vmatpush1.msra.mxu0 0.0
  %1232 = vmatprep.subr.mxu0 0.0
  %1233 = vmatpush1.msra.mxu0 0.0
  %1234 = vmatprep.subr.mxu0 0.0
  %1235 = vmatpush1.msra.mxu0 0.0
  %1236 = vmatprep.subr.mxu0 0.0
  %1237 = vmatpush1.msra.mxu0 0.0
  %1238 = vmatprep.subr.mxu0 0.0
  %1239 = vmatpush1.msra.mxu0 0.0
  %1240 = vmatprep.subr.mxu0 0.0
  %1241 = vmatpush1.msra.mxu0 0.0
  %1242 = vmatprep.subr.mxu0 %v1210
  %1243 = vmatpush1.msra.mxu0 %v1207
  %1244 = vmatprep.subr.mxu0 0.0
  %1245 = vmatpush2.msra.mxu0 0.0
  %1246 = vmatprep.subr.mxu0 0.0
  %1247 = vmatpush2.msra.mxu0 0.0
  %1248 = vmatprep.subr.mxu0 0.0
  %1249 = vmatpush2.msra.mxu0 0.0
  %1250 = vmatprep.subr.mxu0 0.0
  %1251 = vmatpush2.msra.mxu0 0.0
  %1252 = vmatprep.subr.mxu0 0.0
  %1253 = vmatpush2.msra.mxu0 0.0
  %1254 = vmatprep.subr.mxu0 0.0
  %1255 = vmatpush2.msra.mxu0 0.0
  %1256 = vmatprep.subr.mxu0 0.0
  %1257 = vmatpush2.msra.mxu0 0.0
  %1258 = vmatprep.subr.mxu0 0.0
  %1259 = vmatpush2.msra.mxu0 0.0
  %1260 = vmatprep.subr.mxu0 0.0
  %1261 = vmatpush2.msra.mxu0 0.0
  %1262 = vmatprep.subr.mxu0 0.0
  %1263 = vmatpush2.msra.mxu0 0.0
  %1264 = vmatprep.subr.mxu0 0.0
  %1265 = vmatpush2.msra.mxu0 0.0
  %1266 = vmatprep.subr.mxu0 0.0
  %1267 = vmatpush2.msra.mxu0 0.0
  %1268 = vmatprep.subr.mxu0 0.0
  %1269 = vmatpush2.msra.mxu0 0.0
  %1270 = vmatprep.subr.mxu0 0.0
  %1271 = vmatpush2.msra.mxu0 0.0
  %1272 = vmatprep.subr.mxu0 0.0
  %1273 = vmatpush2.msra.mxu0 0.0
  %1274 = vmatprep.subr.mxu0 0.0
  %1275 = vmatpush2.msra.mxu0 0.0
  %1276 = vmatprep.mubr.f32.mxu0 0.0
  %1277 = vmatmul.mubr.f32.gmra.mxu0 %v1204
  %v1278 = vpop.f32.mrf.mxu0
  %v1279 = vadd.f32 %v1197, %v1278
  %v1280 = vpop.f32.mrf.mxu0
  %v1281 = vadd.f32 %v1200, %v1280
  %1282 = vdwg.mxu0
  %1283 = vst [vmem:[%s15] sm:$0xff] %v132
  %1284 = vst [vmem:[%s15 + $0x8] sm:$0xff] %v134
  %1285 = vst [vmem:[%s15 + $0x10] sm:$0xff] %v1279
  %1286 = vst [vmem:[%s15 + $0x18] sm:$0xff] %v1281
  // Predicated region
  $region62: #{ffc_forward.1} parent=0 // pred_check
    _
  $region63: #{ffc_forward.1} parent=0 // pred_check_branch
    %1288 = sbr.rel (0) target = $region65
  $region64: #{ffc_forward.1} parent=0 // pred_region
    _
  $region65: #{ffc_forward.1} parent=0 // pred_fallthru
    _
  // Predicated region
  $region66: #{ffc_forward.1} parent=0 // pred_check
    _
  $region67: #{ffc_forward.1} parent=0 // pred_check_branch
    %1290 = sbr.rel (0) target = $region69
  $region68: #{ffc_forward.1} parent=0 // pred_region
    _
  $region69: #{ffc_forward.1} parent=0 // pred_fallthru
    _

</llo_original>
